<compile_context>
chip_gen: v7x
topology: tpu7x:2x2x1
jax: 0.10.0
libtpu: 0.0.40
codegen_flags: <defaults>
</compile_context>

<pallas_src>
import jax
import jax.numpy as jnp
from jax.experimental import pallas as pl
from jax.experimental.pallas import tpu as pltpu

LANE = 128
BN_EPS = 1e-5


def _round_up(x, m):
    return (x + m - 1) // m * m


def _cdiv(a, b):
    return (a + b - 1) // b


def _vmem_limit_bytes():
    """Scoped-VMEM limit with headroom, per generation (v5e/v6e: 128 MiB phys, v7x: 64 MiB)."""
    phys = 64 * 1024 * 1024
    try:
        phys = int(pltpu.get_tpu_info().vmem_capacity_bytes)
    except Exception:
        pass
    return max(32 * 1024 * 1024, min(phys - 16 * 1024 * 1024, 96 * 1024 * 1024))


# ----------------------------------------------------------------------------
# conv1 (7x7 stride 2 pad 3): M-tiled im2col GEMM + streaming BN statistics
# ----------------------------------------------------------------------------
def _im2col_nhwc(x, k, stride, pad):
    """x: (N,H,W,C) -> (N*Ho*Wo, k*k*C); flatten order (kh, kw, c)."""
    N, H, W, C = x.shape
    xp = jnp.pad(x, ((0, 0), (pad, pad), (pad, pad), (0, 0)))
    Ho = (H + 2 * pad - k) // stride + 1
    Wo = (W + 2 * pad - k) // stride + 1
    cols = []
    for kh in range(k):
        for kw in range(k):
            cols.append(xp[:, kh:kh + stride * Ho:stride, kw:kw + stride * Wo:stride, :])
    patches = jnp.stack(cols, axis=3)  # (N, Ho, Wo, k*k, C)
    return patches.reshape(N * Ho * Wo, k * k * C), (Ho, Wo)


def _conv1_bn_stats(patches, w_g, *, vmem_limit):
    """patches: (M, K) bf16 (K unpadded), w_g: (K, Cp) bf16 (lane-padded out channels).

    One pass: tiled GEMM on the MXU + streaming per-tile BatchNorm partial sums /
    sums-of-squares (finalized outside the kernel, so M-tiling does not perturb the
    global batch statistics).
    Returns y1 (Mp, Cp) bf16 raw conv1 output, sums / ssqs (n_tiles, 1, Cp) f32.
    """
    M, K = patches.shape
    Cp = w_g.shape[1]

    # Large tiles amortize the ~0.35us/grid-step overhead; cap so the double-buffered
    # input+output tiles comfortably fit the scoped VMEM limit; avoid padding M when
    # the tile count divides it (the common case).
    target = 4096 if vmem_limit >= (80 << 20) else 2048
    cap = max(256, (vmem_limit // 3) // ((K + 2 * Cp) * 2))
    target = max(256, min(target, cap))
    n_tiles = _cdiv(M, target)
    tm = _round_up(_cdiv(M, n_tiles), 8)
    Mp = tm * n_tiles
    if Mp != M:
        # zero rows contribute nothing to the stats and are sliced off afterwards
        patches = jnp.pad(patches, ((0, Mp - M), (0, 0)))

    def kernel(p_ref, w_ref, y_ref, sum_ref, ssq_ref):
        acc = jnp.dot(p_ref[...], w_ref[...], preferred_element_type=jnp.float32)
        # streaming BatchNorm statistics (per-tile partials, finalized outside)
        # TODO(synk): if tolerance ever tightens at very large M, subtract a pilot mean
        # before accumulating acc*acc to avoid E[x^2]-E[x]^2 cancellation.
        sum_ref[0] = jnp.sum(acc, axis=0, keepdims=True)
        ssq_ref[0] = jnp.sum(acc * acc, axis=0, keepdims=True)
        y_ref[...] = acc.astype(y_ref.dtype)

    flops = 2 * Mp * K * Cp
    bytes_accessed = Mp * K * 2 + K * Cp * 2 + Mp * Cp * 2 + 2 * n_tiles * Cp * 4

    y1, sums, ssqs = pl.pallas_call(
        kernel,
        grid=(n_tiles,),
        in_specs=[
            pl.BlockSpec((tm, K), lambda i: (i, 0)),      # K kept whole & unpadded
            pl.BlockSpec((K, Cp), lambda i: (0, 0)),      # resident GEMM weight
        ],
        out_specs=(
            pl.BlockSpec((tm, Cp), lambda i: (i, 0)),
            pl.BlockSpec((1, 1, Cp), lambda i: (i, 0, 0)),
            pl.BlockSpec((1, 1, Cp), lambda i: (i, 0, 0)),
        ),
        out_shape=(
            jax.ShapeDtypeStruct((Mp, Cp), jnp.bfloat16),
            jax.ShapeDtypeStruct((n_tiles, 1, Cp), jnp.float32),
            jax.ShapeDtypeStruct((n_tiles, 1, Cp), jnp.float32),
        ),
        compiler_params=pltpu.CompilerParams(
            dimension_semantics=("parallel",),
            vmem_limit_bytes=vmem_limit,
        ),
        cost_estimate=pl.CostEstimate(
            flops=flops, transcendentals=0, bytes_accessed=bytes_accessed),
    )(patches, w_g)
    return y1, sums, ssqs


# ----------------------------------------------------------------------------
# conv2 (3x3 stride 1 pad 1) + bias + ReLU, no im2col:
# 9 shifted matmuls with value-carried accumulation; output row-tiled.
# ----------------------------------------------------------------------------
def _pick_row_tile(ho, wp, cp, vmem_limit):
    """Pick R | Ho with (R*Wp) % 8 == 0 so the f32 output block stays small."""
    whole_image_bytes = ho * wp * cp * 4
    if whole_image_bytes <= min(4 << 20, vmem_limit // 12):
        return ho                                   # one block per image (always legal)
    target_rows = max(1, (2 << 20) // (wp * cp * 4))
    best = None
    for r in range(1, ho + 1):
        if ho % r == 0 and (r * wp) % 8 == 0 and r <= target_rows:
            best = r
    return best if best is not None else ho


def _conv2_bias_relu(y1p_flat, w2_p, b2_p, ho, wp, cp, *, vmem_limit):
    """y1p_flat: (N, (Ho+3)*Wp, Cp) bf16 zero-padded BN output, flattened per image.
    w2_p: (9, Cp, Cp) bf16 plain conv2 weights; b2_p: (1, Cp) f32.
    Returns (N, Ho*Wp, Cp) f32 (caller strips the 2 width-pad columns & pad channels)."""
    N, HWp, _ = y1p_flat.shape
    hw_out = ho * wp
    row_t = _pick_row_tile(ho, wp, cp, vmem_limit)
    n_rt = ho // row_t
    rwp = row_t * wp
    offsets = [kh * wp + kw for kh in range(3) for kw in range(3)]

    def kernel(x_ref, w_ref, b_ref, o_ref):
        # tap (kh, kw): out[ho*Wp + wo] needs input flat index ho*Wp + wo + kh*Wp + kw
        if n_rt > 1:
            base = pl.multiple_of(pl.program_id(1) * rwp, 8)
        else:
            base = 0
        # value-carried accumulation: dots chain through the MXU accumulator,
        # bias + ReLU applied once, single store of the output block.
        acc = jnp.dot(x_ref[0, pl.ds(base + offsets[0], rwp), :], w_ref[0],
                      preferred_element_type=jnp.float32)
        for t in range(1, 9):
            acc = acc + jnp.dot(x_ref[0, pl.ds(base + offsets[t], rwp), :], w_ref[t],
                                preferred_element_type=jnp.float32)
        o_ref[0] = jnp.maximum(acc + b_ref[...], 0.0)

    flops = 2 * N * 9 * hw_out * cp * cp
    bytes_accessed = N * HWp * cp * 2 + 9 * cp * cp * 2 + cp * 4 + N * hw_out * cp * 4

    # TODO(synk): for very large images (>=512^2) also halo-tile the *input* rows instead
    # of keeping the whole padded image resident, and pack taps to widen K for the
    # 256x256 MXUs on v6e/v7x.
    return pl.pallas_call(
        kernel,
        grid=(N, n_rt),
        in_specs=[
            pl.BlockSpec((1, HWp, cp), lambda n, r: (n, 0, 0)),   # image resident across row tiles
            pl.BlockSpec((9, cp, cp), lambda n, r: (0, 0, 0)),    # resident weights
            pl.BlockSpec((1, cp), lambda n, r: (0, 0)),           # resident bias
        ],
        out_specs=pl.BlockSpec((1, rwp, cp), lambda n, r: (n, r, 0)),
        out_shape=jax.ShapeDtypeStruct((N, hw_out, cp), jnp.float32),
        compiler_params=pltpu.CompilerParams(
            dimension_semantics=("parallel", "parallel"),
            vmem_limit_bytes=vmem_limit,
        ),
        cost_estimate=pl.CostEstimate(
            flops=flops, transcendentals=0, bytes_accessed=bytes_accessed),
    )(y1p_flat, w2_p, b2_p)


# ----------------------------------------------------------------------------
# Wrapper
# ----------------------------------------------------------------------------
def basic_down_sample(x_nchw, params):
    """Forward of BasicDownSample. x_nchw: (N, Cin, H, W) -> (N, Cout, H//2, W//2)."""
    w1, b1, gamma, beta, w2, b2 = params
    del b1  # a conv bias feeding train-mode BatchNorm is cancelled exactly by the mean subtraction
    cout = w1.shape[0]
    cp = _round_up(cout, LANE)           # lane padding only (no indicator channel)
    vmem_limit = _vmem_limit_bytes()

    N, _, H, W = x_nchw.shape
    x = jnp.transpose(x_nchw, (0, 2, 3, 1)).astype(jnp.bfloat16)   # NHWC, bf16 activations

    # ---- conv1: im2col GEMM (K unpadded) + streaming BN stats ----
    patches1, (Ho, Wo) = _im2col_nhwc(x, k=7, stride=2, pad=3)
    K1 = patches1.shape[1]
    w1_g = jnp.transpose(w1, (2, 3, 1, 0)).reshape(K1, cout).astype(jnp.float32)
    w1_g = jnp.pad(w1_g, ((0, 0), (0, cp - cout))).astype(jnp.bfloat16)
    M1 = N * Ho * Wo

    y1, sums, ssqs = _conv1_bn_stats(patches1, w1_g, vmem_limit=vmem_limit)

    # ---- finalize BatchNorm batch statistics (biased variance, eps = 1e-5) ----
    s = jnp.sum(sums[:, 0, :cout], axis=0)
    sq = jnp.sum(ssqs[:, 0, :cout], axis=0)
    mean = s / M1
    var = jnp.maximum(sq / M1 - mean * mean, 0.0)
    scale = gamma.astype(jnp.float32) * jax.lax.rsqrt(var + BN_EPS)
    shift = beta.astype(jnp.float32) - mean * scale

    # ---- BN affine fused into the single pad/reshape pass between the two kernels;
    #      padded lanes get scale = shift = 0 so they stay exactly zero ----
    scale_p = jnp.zeros((cp,), jnp.float32).at[:cout].set(scale)
    shift_p = jnp.zeros((cp,), jnp.float32).at[:cout].set(shift)
    y1_bn = (y1[:M1].reshape(N, Ho, Wo, cp).astype(jnp.float32) * scale_p
             + shift_p).astype(jnp.bfloat16)
    # +1 top / +2 bottom rows (extra bottom row only keeps the shifted flat windows of
    # the two discarded width-pad output columns in bounds), +1 left / +1 right columns.
    # TODO(synk): have conv1 write straight into this padded layout to save one
    # activation read+write between the two kernels.
    y1p = jnp.pad(y1_bn, ((0, 0), (1, 2), (1, 1), (0, 0)))
    Wp = Wo + 2
    y1p_flat = y1p.reshape(N, (Ho + 3) * Wp, cp)

    # ---- conv2 weights: channel-pad only (BN already applied to the activations) ----
    w2_p = jnp.transpose(w2, (2, 3, 1, 0)).reshape(9, cout, cout).astype(jnp.float32)
    w2_p = jnp.pad(w2_p, ((0, 0), (0, cp - cout), (0, cp - cout))).astype(jnp.bfloat16)
    b2_p = jnp.zeros((1, cp), jnp.float32).at[0, :cout].set(b2.astype(jnp.float32))

    y2 = _conv2_bias_relu(y1p_flat, w2_p, b2_p, Ho, Wp, cp, vmem_limit=vmem_limit)
    y2 = y2.reshape(N, Ho, Wp, cp)[:, :, :Wo, :cout]   # strip width-pad cols & pad channels
    return jnp.transpose(y2, (0, 3, 1, 2))             # NHWC -> NCHW, f32


# ----------------------------------------------------------------------------
# Reference (pure XLA) and test harness
# ----------------------------------------------------------------------------
def _reference(x, params):
    w1, b1, gamma, beta, w2, b2 = params
    dn = ("NCHW", "OIHW", "NCHW")
    y = jax.lax.conv_general_dilated(x, w1, (2, 2), ((3, 3), (3, 3)), dimension_numbers=dn)
    y = y + b1[None, :, None, None]
    mean = jnp.mean(y, axis=(0, 2, 3), keepdims=True)
    var = jnp.mean((y - mean) ** 2, axis=(0, 2, 3), keepdims=True)
    y = ((y - mean) * jax.lax.rsqrt(var + BN_EPS) * gamma[None, :, None, None]
         + beta[None, :, None, None])
    y = jax.lax.conv_general_dilated(y, w2, (1, 1), ((1, 1), (1, 1)), dimension_numbers=dn)
    y = y + b2[None, :, None, None]
    return jnp.maximum(y, 0.0)


def init_params(key, in_channels, out_channels):
    k1, k2, k3, k4, k5, k6 = jax.random.split(key, 6)
    w1 = jax.random.normal(k1, (out_channels, in_channels, 7, 7), jnp.float32) * 0.05
    b1 = jax.random.normal(k2, (out_channels,), jnp.float32) * 0.05
    gamma = 1.0 + 0.1 * jax.random.normal(k3, (out_channels,), jnp.float32)
    beta = 0.1 * jax.random.normal(k4, (out_channels,), jnp.float32)
    w2 = jax.random.normal(k5, (out_channels, out_channels, 3, 3), jnp.float32) * 0.05
    b2 = jax.random.normal(k6, (out_channels,), jnp.float32) * 0.05
    return (w1, b1, gamma, beta, w2, b2)


if __name__ == "__main__":
    key = jax.random.PRNGKey(0)
    kx, kp = jax.random.split(key)

    N, C_in, C_out, H, W = 2, 4, 8, 16, 16
    x = jax.random.normal(kx, (N, C_in, H, W), jnp.float32)
    params = init_params(kp, C_in, C_out)

    fwd = jax.jit(basic_down_sample)
    out = jax.block_until_ready(fwd(x, params))

    assert out.shape == (N, C_out, H // 2, W // 2), out.shape
    assert bool(jnp.all(out >= 0.0))            # ReLU output
    assert bool(jnp.all(jnp.isfinite(out)))

    ref = _reference(x, params)
    max_err = float(jnp.max(jnp.abs(out - ref)))
    assert max_err < 8e-2, f"max abs err vs reference: {max_err}"
    print("KERNEL_OK")
</pallas_src>

<mosaic_0001>
module attributes {stable_mosaic.version = 11 : i64} {
  func.func @kernel(%arg0: i32, %arg1: memref<128x196xbf16, #tpu.memory_space<vmem>>, %arg2: memref<196x128xbf16, #tpu.memory_space<vmem>>, %arg3: memref<128x128xbf16, #tpu.memory_space<vmem>>, %arg4: memref<1x1x128xf32, #tpu.memory_space<vmem>>, %arg5: memref<1x1x128xf32, #tpu.memory_space<vmem>>) attributes {dimension_semantics = [#tpu.dimension_semantics<parallel>], iteration_bounds = array<i64: 1>, scalar_prefetch = 0 : i64, scratch_operands = 0 : i64, tpu.core_type = #tpu.core_type<tc>, window_params = [{transform_indices = @transform_0, window_bounds = array<i64: 128, 196>}, {pipeline_mode = #tpu.pipeline_mode<synchronous>, transform_indices = @transform_1, window_bounds = array<i64: 196, 128>}, {transform_indices = @transform_2, window_bounds = array<i64: 128, 128>}, {transform_indices = @transform_3, window_bounds = array<i64: 1, 1, 128>}, {transform_indices = @transform_4, window_bounds = array<i64: 1, 1, 128>}]} {
    %c0 = arith.constant 0 : index
    %c0_0 = arith.constant 0 : index
    %0 = vector.load %arg1[%c0, %c0_0] : memref<128x196xbf16, #tpu.memory_space<vmem>>, vector<128x196xbf16>
    %c0_1 = arith.constant 0 : index
    %c0_2 = arith.constant 0 : index
    %1 = vector.load %arg2[%c0_1, %c0_2] : memref<196x128xbf16, #tpu.memory_space<vmem>>, vector<196x128xbf16>
    %cst = arith.constant dense<0.000000e+00> : vector<128x128xf32>
    %2 = tpu.matmul %0, %1, %cst {dimension_numbers = #tpu.dot_dimension_numbers<[1], [0], [0], [1], [0, 0, 1, 1], [], []>} : vector<128x196xbf16>, vector<196x128xbf16>, vector<128x128xf32> -> vector<128x128xf32>
    %cst_3 = arith.constant dense<0.000000e+00> : vector<128xf32>
    %3 = vector.multi_reduction <add>, %2, %cst_3 [0] : vector<128x128xf32> to vector<128xf32>
    %4 = vector.shape_cast %3 : vector<128xf32> to vector<1x128xf32>
    %c0_4 = arith.constant 0 : index
    %c0_5 = arith.constant 0 : index
    %c0_6 = arith.constant 0 : index
    %5 = vector.load %arg4[%c0_4, %c0_5, %c0_6] : memref<1x1x128xf32, #tpu.memory_space<vmem>>, vector<1x1x128xf32>
    %6 = vector.shape_cast %5 : vector<1x1x128xf32> to vector<1x128xf32>
    %7 = vector.shape_cast %4 : vector<1x128xf32> to vector<1x1x128xf32>
    tpu.vector_store %arg4[%c0_4, %c0_5, %c0_6], %7 {strides = array<i32>} : memref<1x1x128xf32, #tpu.memory_space<vmem>>, vector<1x1x128xf32>,
    %8 = arith.mulf %2, %2 : vector<128x128xf32>
    %cst_7 = arith.constant dense<0.000000e+00> : vector<128xf32>
    %9 = vector.multi_reduction <add>, %8, %cst_7 [0] : vector<128x128xf32> to vector<128xf32>
    %10 = vector.shape_cast %9 : vector<128xf32> to vector<1x128xf32>
    %c0_8 = arith.constant 0 : index
    %c0_9 = arith.constant 0 : index
    %c0_10 = arith.constant 0 : index
    %11 = vector.load %arg5[%c0_8, %c0_9, %c0_10] : memref<1x1x128xf32, #tpu.memory_space<vmem>>, vector<1x1x128xf32>
    %12 = vector.shape_cast %11 : vector<1x1x128xf32> to vector<1x128xf32>
    %13 = vector.shape_cast %10 : vector<1x128xf32> to vector<1x1x128xf32>
    tpu.vector_store %arg5[%c0_8, %c0_9, %c0_10], %13 {strides = array<i32>} : memref<1x1x128xf32, #tpu.memory_space<vmem>>, vector<1x1x128xf32>,
    %14 = arith.truncf %2 : vector<128x128xf32> to vector<128x128xbf16>
    %c0_11 = arith.constant 0 : index
    %c0_12 = arith.constant 0 : index
    %15 = vector.load %arg3[%c0_11, %c0_12] : memref<128x128xbf16, #tpu.memory_space<vmem>>, vector<128x128xbf16>
    tpu.vector_store %arg3[%c0_11, %c0_12], %14 {strides = array<i32>} : memref<128x128xbf16, #tpu.memory_space<vmem>>, vector<128x128xbf16>,
    return
  }
  func.func @transform_0(%arg0: i32) -> (i32, i32) {
    %c0_i32 = arith.constant 0 : i32
    %c0_i32_0 = arith.constant 0 : i32
    return %arg0, %c0_i32 : i32, i32
  }
  func.func @transform_1(%arg0: i32) -> (i32, i32) {
    %c0_i32 = arith.constant 0 : i32
    %c0_i32_0 = arith.constant 0 : i32
    %c0_i32_1 = arith.constant 0 : i32
    return %c0_i32, %c0_i32_0 : i32, i32
  }
  func.func @transform_2(%arg0: i32) -> (i32, i32) {
    %c0_i32 = arith.constant 0 : i32
    %c0_i32_0 = arith.constant 0 : i32
    return %arg0, %c0_i32 : i32, i32
  }
  func.func @transform_3(%arg0: i32) -> (i32, i32, i32) {
    %c0_i32 = arith.constant 0 : i32
    %c0_i32_0 = arith.constant 0 : i32
    %c0_i32_1 = arith.constant 0 : i32
    return %arg0, %c0_i32, %c0_i32_0 : i32, i32, i32
  }
  func.func @transform_4(%arg0: i32) -> (i32, i32, i32) {
    %c0_i32 = arith.constant 0 : i32
    %c0_i32_0 = arith.constant 0 : i32
    %c0_i32_1 = arith.constant 0 : i32
    return %arg0, %c0_i32, %c0_i32_0 : i32, i32, i32
  }
}

module attributes {stable_mosaic.version = 11 : i64} {
  func.func @kernel(%arg0: i32, %arg1: i32, %arg2: memref<1x110x128xbf16, #tpu.memory_space<vmem>>, %arg3: memref<9x128x128xbf16, #tpu.memory_space<vmem>>, %arg4: memref<1x128xf32, #tpu.memory_space<vmem>>, %arg5: memref<1x80x128xf32, #tpu.memory_space<vmem>>) attributes {dimension_semantics = [#tpu.dimension_semantics<parallel>, #tpu.dimension_semantics<parallel>], iteration_bounds = array<i64: 2, 1>, scalar_prefetch = 0 : i64, scratch_operands = 0 : i64, tpu.core_type = #tpu.core_type<tc>, window_params = [{transform_indices = @transform_0, window_bounds = array<i64: 1, 110, 128>}, {pipeline_mode = #tpu.pipeline_mode<synchronous>, transform_indices = @transform_1, window_bounds = array<i64: 9, 128, 128>}, {pipeline_mode = #tpu.pipeline_mode<synchronous>, transform_indices = @transform_2, window_bounds = array<i64: 1, 128>}, {transform_indices = @transform_3, window_bounds = array<i64: 1, 80, 128>}]} {
    %c0 = arith.constant 0 : index
    %c0_0 = arith.constant 0 : index
    %c0_1 = arith.constant 0 : index
    %0 = vector.load %arg2[%c0, %c0_0, %c0_1] : memref<1x110x128xbf16, #tpu.memory_space<vmem>>, vector<1x80x128xbf16>
    %1 = vector.shape_cast %0 : vector<1x80x128xbf16> to vector<80x128xbf16>
    %c0_2 = arith.constant 0 : index
    %c0_3 = arith.constant 0 : index
    %c0_4 = arith.constant 0 : index
    %2 = vector.load %arg3[%c0_2, %c0_3, %c0_4] : memref<9x128x128xbf16, #tpu.memory_space<vmem>>, vector<1x128x128xbf16>
    %3 = vector.shape_cast %2 : vector<1x128x128xbf16> to vector<128x128xbf16>
    %cst = arith.constant dense<0.000000e+00> : vector<80x128xf32>
    %4 = tpu.matmul %1, %3, %cst {dimension_numbers = #tpu.dot_dimension_numbers<[1], [0], [0], [1], [0, 0, 1, 1], [], []>} : vector<80x128xbf16>, vector<128x128xbf16>, vector<80x128xf32> -> vector<80x128xf32>
    %c0_5 = arith.constant 0 : index
    %c1 = arith.constant 1 : index
    %c0_6 = arith.constant 0 : index
    %5 = vector.load %arg2[%c0_5, %c1, %c0_6] : memref<1x110x128xbf16, #tpu.memory_space<vmem>>, vector<1x80x128xbf16>
    %6 = vector.shape_cast %5 : vector<1x80x128xbf16> to vector<80x128xbf16>
    %c1_7 = arith.constant 1 : index
    %c0_8 = arith.constant 0 : index
    %c0_9 = arith.constant 0 : index
    %7 = vector.load %arg3[%c1_7, %c0_8, %c0_9] : memref<9x128x128xbf16, #tpu.memory_space<vmem>>, vector<1x128x128xbf16>
    %8 = vector.shape_cast %7 : vector<1x128x128xbf16> to vector<128x128xbf16>
    %cst_10 = arith.constant dense<0.000000e+00> : vector<80x128xf32>
    %9 = tpu.matmul %6, %8, %cst_10 {dimension_numbers = #tpu.dot_dimension_numbers<[1], [0], [0], [1], [0, 0, 1, 1], [], []>} : vector<80x128xbf16>, vector<128x128xbf16>, vector<80x128xf32> -> vector<80x128xf32>
    %10 = arith.addf %4, %9 : vector<80x128xf32>
    %c0_11 = arith.constant 0 : index
    %c2 = arith.constant 2 : index
    %c0_12 = arith.constant 0 : index
    %11 = vector.load %arg2[%c0_11, %c2, %c0_12] : memref<1x110x128xbf16, #tpu.memory_space<vmem>>, vector<1x80x128xbf16>
    %12 = vector.shape_cast %11 : vector<1x80x128xbf16> to vector<80x128xbf16>
    %c2_13 = arith.constant 2 : index
    %c0_14 = arith.constant 0 : index
    %c0_15 = arith.constant 0 : index
    %13 = vector.load %arg3[%c2_13, %c0_14, %c0_15] : memref<9x128x128xbf16, #tpu.memory_space<vmem>>, vector<1x128x128xbf16>
    %14 = vector.shape_cast %13 : vector<1x128x128xbf16> to vector<128x128xbf16>
    %cst_16 = arith.constant dense<0.000000e+00> : vector<80x128xf32>
    %15 = tpu.matmul %12, %14, %cst_16 {dimension_numbers = #tpu.dot_dimension_numbers<[1], [0], [0], [1], [0, 0, 1, 1], [], []>} : vector<80x128xbf16>, vector<128x128xbf16>, vector<80x128xf32> -> vector<80x128xf32>
    %16 = arith.addf %10, %15 : vector<80x128xf32>
    %c0_17 = arith.constant 0 : index
    %c10 = arith.constant 10 : index
    %c0_18 = arith.constant 0 : index
    %17 = vector.load %arg2[%c0_17, %c10, %c0_18] : memref<1x110x128xbf16, #tpu.memory_space<vmem>>, vector<1x80x128xbf16>
    %18 = vector.shape_cast %17 : vector<1x80x128xbf16> to vector<80x128xbf16>
    %c3 = arith.constant 3 : index
    %c0_19 = arith.constant 0 : index
    %c0_20 = arith.constant 0 : index
    %19 = vector.load %arg3[%c3, %c0_19, %c0_20] : memref<9x128x128xbf16, #tpu.memory_space<vmem>>, vector<1x128x128xbf16>
    %20 = vector.shape_cast %19 : vector<1x128x128xbf16> to vector<128x128xbf16>
    %cst_21 = arith.constant dense<0.000000e+00> : vector<80x128xf32>
    %21 = tpu.matmul %18, %20, %cst_21 {dimension_numbers = #tpu.dot_dimension_numbers<[1], [0], [0], [1], [0, 0, 1, 1], [], []>} : vector<80x128xbf16>, vector<128x128xbf16>, vector<80x128xf32> -> vector<80x128xf32>
    %22 = arith.addf %16, %21 : vector<80x128xf32>
    %c0_22 = arith.constant 0 : index
    %c11 = arith.constant 11 : index
    %c0_23 = arith.constant 0 : index
    %23 = vector.load %arg2[%c0_22, %c11, %c0_23] : memref<1x110x128xbf16, #tpu.memory_space<vmem>>, vector<1x80x128xbf16>
    %24 = vector.shape_cast %23 : vector<1x80x128xbf16> to vector<80x128xbf16>
    %c4 = arith.constant 4 : index
    %c0_24 = arith.constant 0 : index
    %c0_25 = arith.constant 0 : index
    %25 = vector.load %arg3[%c4, %c0_24, %c0_25] : memref<9x128x128xbf16, #tpu.memory_space<vmem>>, vector<1x128x128xbf16>
    %26 = vector.shape_cast %25 : vector<1x128x128xbf16> to vector<128x128xbf16>
    %cst_26 = arith.constant dense<0.000000e+00> : vector<80x128xf32>
    %27 = tpu.matmul %24, %26, %cst_26 {dimension_numbers = #tpu.dot_dimension_numbers<[1], [0], [0], [1], [0, 0, 1, 1], [], []>} : vector<80x128xbf16>, vector<128x128xbf16>, vector<80x128xf32> -> vector<80x128xf32>
    %28 = arith.addf %22, %27 : vector<80x128xf32>
    %c0_27 = arith.constant 0 : index
    %c12 = arith.constant 12 : index
    %c0_28 = arith.constant 0 : index
    %29 = vector.load %arg2[%c0_27, %c12, %c0_28] : memref<1x110x128xbf16, #tpu.memory_space<vmem>>, vector<1x80x128xbf16>
    %30 = vector.shape_cast %29 : vector<1x80x128xbf16> to vector<80x128xbf16>
    %c5 = arith.constant 5 : index
    %c0_29 = arith.constant 0 : index
    %c0_30 = arith.constant 0 : index
    %31 = vector.load %arg3[%c5, %c0_29, %c0_30] : memref<9x128x128xbf16, #tpu.memory_space<vmem>>, vector<1x128x128xbf16>
    %32 = vector.shape_cast %31 : vector<1x128x128xbf16> to vector<128x128xbf16>
    %cst_31 = arith.constant dense<0.000000e+00> : vector<80x128xf32>
    %33 = tpu.matmul %30, %32, %cst_31 {dimension_numbers = #tpu.dot_dimension_numbers<[1], [0], [0], [1], [0, 0, 1, 1], [], []>} : vector<80x128xbf16>, vector<128x128xbf16>, vector<80x128xf32> -> vector<80x128xf32>
    %34 = arith.addf %28, %33 : vector<80x128xf32>
    %c0_32 = arith.constant 0 : index
    %c20 = arith.constant 20 : index
    %c0_33 = arith.constant 0 : index
    %35 = vector.load %arg2[%c0_32, %c20, %c0_33] : memref<1x110x128xbf16, #tpu.memory_space<vmem>>, vector<1x80x128xbf16>
    %36 = vector.shape_cast %35 : vector<1x80x128xbf16> to vector<80x128xbf16>
    %c6 = arith.constant 6 : index
    %c0_34 = arith.constant 0 : index
    %c0_35 = arith.constant 0 : index
    %37 = vector.load %arg3[%c6, %c0_34, %c0_35] : memref<9x128x128xbf16, #tpu.memory_space<vmem>>, vector<1x128x128xbf16>
    %38 = vector.shape_cast %37 : vector<1x128x128xbf16> to vector<128x128xbf16>
    %cst_36 = arith.constant dense<0.000000e+00> : vector<80x128xf32>
    %39 = tpu.matmul %36, %38, %cst_36 {dimension_numbers = #tpu.dot_dimension_numbers<[1], [0], [0], [1], [0, 0, 1, 1], [], []>} : vector<80x128xbf16>, vector<128x128xbf16>, vector<80x128xf32> -> vector<80x128xf32>
    %40 = arith.addf %34, %39 : vector<80x128xf32>
    %c0_37 = arith.constant 0 : index
    %c21 = arith.constant 21 : index
    %c0_38 = arith.constant 0 : index
    %41 = vector.load %arg2[%c0_37, %c21, %c0_38] : memref<1x110x128xbf16, #tpu.memory_space<vmem>>, vector<1x80x128xbf16>
    %42 = vector.shape_cast %41 : vector<1x80x128xbf16> to vector<80x128xbf16>
    %c7 = arith.constant 7 : index
    %c0_39 = arith.constant 0 : index
    %c0_40 = arith.constant 0 : index
    %43 = vector.load %arg3[%c7, %c0_39, %c0_40] : memref<9x128x128xbf16, #tpu.memory_space<vmem>>, vector<1x128x128xbf16>
    %44 = vector.shape_cast %43 : vector<1x128x128xbf16> to vector<128x128xbf16>
    %cst_41 = arith.constant dense<0.000000e+00> : vector<80x128xf32>
    %45 = tpu.matmul %42, %44, %cst_41 {dimension_numbers = #tpu.dot_dimension_numbers<[1], [0], [0], [1], [0, 0, 1, 1], [], []>} : vector<80x128xbf16>, vector<128x128xbf16>, vector<80x128xf32> -> vector<80x128xf32>
    %46 = arith.addf %40, %45 : vector<80x128xf32>
    %c0_42 = arith.constant 0 : index
    %c22 = arith.constant 22 : index
    %c0_43 = arith.constant 0 : index
    %47 = vector.load %arg2[%c0_42, %c22, %c0_43] : memref<1x110x128xbf16, #tpu.memory_space<vmem>>, vector<1x80x128xbf16>
    %48 = vector.shape_cast %47 : vector<1x80x128xbf16> to vector<80x128xbf16>
    %c8 = arith.constant 8 : index
    %c0_44 = arith.constant 0 : index
    %c0_45 = arith.constant 0 : index
    %49 = vector.load %arg3[%c8, %c0_44, %c0_45] : memref<9x128x128xbf16, #tpu.memory_space<vmem>>, vector<1x128x128xbf16>
    %50 = vector.shape_cast %49 : vector<1x128x128xbf16> to vector<128x128xbf16>
    %cst_46 = arith.constant dense<0.000000e+00> : vector<80x128xf32>
    %51 = tpu.matmul %48, %50, %cst_46 {dimension_numbers = #tpu.dot_dimension_numbers<[1], [0], [0], [1], [0, 0, 1, 1], [], []>} : vector<80x128xbf16>, vector<128x128xbf16>, vector<80x128xf32> -> vector<80x128xf32>
    %52 = arith.addf %46, %51 : vector<80x128xf32>
    %c0_47 = arith.constant 0 : index
    %c0_48 = arith.constant 0 : index
    %53 = vector.load %arg4[%c0_47, %c0_48] : memref<1x128xf32, #tpu.memory_space<vmem>>, vector<1x128xf32>
    %54 = vector.broadcast %53 : vector<1x128xf32> to vector<80x128xf32>
    %55 = arith.addf %52, %54 : vector<80x128xf32>
    %cst_49 = arith.constant 0.000000e+00 : f32
    %56 = vector.broadcast %cst_49 : f32 to vector<80x128xf32>
    %57 = arith.maximumf %55, %56 : vector<80x128xf32>
    %c0_50 = arith.constant 0 : index
    %c0_51 = arith.constant 0 : index
    %c0_52 = arith.constant 0 : index
    %58 = vector.load %arg5[%c0_50, %c0_51, %c0_52] : memref<1x80x128xf32, #tpu.memory_space<vmem>>, vector<1x80x128xf32>
    %59 = vector.shape_cast %58 : vector<1x80x128xf32> to vector<80x128xf32>
    %60 = vector.shape_cast %57 : vector<80x128xf32> to vector<1x80x128xf32>
    tpu.vector_store %arg5[%c0_50, %c0_51, %c0_52], %60 {strides = array<i32>} : memref<1x80x128xf32, #tpu.memory_space<vmem>>, vector<1x80x128xf32>,
    return
  }
  func.func @transform_0(%arg0: i32, %arg1: i32) -> (i32, i32, i32) {
    %c0_i32 = arith.constant 0 : i32
    %c0_i32_0 = arith.constant 0 : i32
    %c0_i32_1 = arith.constant 0 : i32
    return %arg0, %c0_i32, %c0_i32_0 : i32, i32, i32
  }
  func.func @transform_1(%arg0: i32, %arg1: i32) -> (i32, i32, i32) {
    %c0_i32 = arith.constant 0 : i32
    %c0_i32_0 = arith.constant 0 : i32
    %c0_i32_1 = arith.constant 0 : i32
    %c0_i32_2 = arith.constant 0 : i32
    return %c0_i32, %c0_i32_0, %c0_i32_1 : i32, i32, i32
  }
  func.func @transform_2(%arg0: i32, %arg1: i32) -> (i32, i32) {
    %c0_i32 = arith.constant 0 : i32
    %c0_i32_0 = arith.constant 0 : i32
    %c0_i32_1 = arith.constant 0 : i32
    return %c0_i32, %c0_i32_0 : i32, i32
  }
  func.func @transform_3(%arg0: i32, %arg1: i32) -> (i32, i32, i32) {
    %c0_i32 = arith.constant 0 : i32
    %c0_i32_0 = arith.constant 0 : i32
    return %arg0, %arg1, %c0_i32 : i32, i32, i32
  }
}

</mosaic_0001>

<llo_original>
// kernel: basic_down_sample.2
$region0: #{basic_down_sample.2}
  #allocation0 [shape = 'u32[]', space=smem, size = 0x4, offset = 0x4, fixed_abs, tag = 'smem constant byte address 0x4 - core index']
  #allocation1 [shape = 'u32[144,128]{1,0:T(1,128)}', space=vmem, size = 0x12000, scoped, tag = 'internal scratch']
  %s0 = inlined_call_operand.vmem [shape: bf16[128,196], index: 0, kind: input, shape index: {}]
  %s1 = inlined_call_operand.vmem [shape: bf16[196,128], index: 1, kind: input, shape index: {}]
  %s2 = inlined_call_operand.vmem [shape: bf16[128,128], index: 2, kind: output, shape index: {0}]
  %s3 = inlined_call_operand.vmem [shape: f32[1,1,128], index: 3, kind: output, shape index: {1}]
  %s4 = inlined_call_operand.vmem [shape: f32[1,1,128], index: 4, kind: output, shape index: {2}]
  %5 = xla_tuple %s2, %s3, %s4
  %s6 = sld [smem:[#allocation0]]
  $region34: #{basic_down_sample.2} parent=0
    _
  %s8 = ssub.s32 1, %s6
  %s9 = scalar_select 0, %s8, %s6
  // Predicated region
  $region2: #{basic_down_sample.2} parent=0 // pred_check
    _
  $region3: #{basic_down_sample.2} parent=0 // pred_check_branch
    %11 = sbr.rel (0) target = $region5
  $region4: #{basic_down_sample.2} parent=0 // pred_region
    _
  $region5: #{basic_down_sample.2} parent=0 // pred_fallthru
    _
  // Predicated region
  $region6: #{basic_down_sample.2} parent=0 // pred_check
    _
  $region7: #{basic_down_sample.2} parent=0 // pred_check_branch
    %13 = sbr.rel (0) target = $region9
  $region8: #{basic_down_sample.2} parent=0 // pred_region
    _
  $region9: #{basic_down_sample.2} parent=0 // pred_fallthru
    _
  %v15 = vld [vmem:[%s0] sm:$0xff]
  %v16 = vld [vmem:[%s0 + $0x8] sm:$0xff]
  %v17 = vld [vmem:[%s0 + $0x10] sm:$0xff]
  %v18 = vld [vmem:[%s0 + $0x18] sm:$0xff]
  %v19 = vld [vmem:[%s0 + $0x20] sm:$0xff]
  %v20 = vld [vmem:[%s0 + $0x28] sm:$0xff]
  %v21 = vld [vmem:[%s0 + $0x30] sm:$0xff]
  %v22 = vld [vmem:[%s0 + $0x38] sm:$0xff]
  %v23 = vld [vmem:[%s0 + $0x40] sm:$0xff]
  %v24 = vld [vmem:[%s0 + $0x48] sm:$0xff]
  %v25 = vld [vmem:[%s0 + $0x50] sm:$0xff]
  %v26 = vld [vmem:[%s0 + $0x58] sm:$0xff]
  %v27 = vld [vmem:[%s0 + $0x60] sm:$0xff]
  %v28 = vld [vmem:[%s0 + $0x68] sm:$0xff]
  %v29 = vld [vmem:[%s0 + $0x70] sm:$0xff]
  %v30 = vld [vmem:[%s0 + $0x78] sm:$0xff]
  %v31 = vld [vmem:[%s1] sm:$0xf]
  %v32 = vld [vmem:[%s1 + $0x4] sm:$0xf]
  %v33 = vld [vmem:[%s1 + $0x8] sm:$0xf]
  %v34 = vld [vmem:[%s1 + $0xc] sm:$0xf]
  %v35 = vld [vmem:[%s1 + $0x10] sm:$0xf]
  %v36 = vld [vmem:[%s1 + $0x14] sm:$0xf]
  %v37 = vld [vmem:[%s1 + $0x18] sm:$0xf]
  %v38 = vld [vmem:[%s1 + $0x1c] sm:$0xf]
  %v39 = vld [vmem:[%s1 + $0x20] sm:$0xf]
  %v40 = vld [vmem:[%s1 + $0x24] sm:$0xf]
  %v41 = vld [vmem:[%s1 + $0x28] sm:$0xf]
  %v42 = vld [vmem:[%s1 + $0x2c] sm:$0xf]
  %v43 = vld [vmem:[%s1 + $0x30] sm:$0xf]
  %v44 = vld [vmem:[%s1 + $0x34] sm:$0xf]
  %v45 = vld [vmem:[%s1 + $0x38] sm:$0xf]
  %v46 = vld [vmem:[%s1 + $0x3c] sm:$0xf]
  %v47 = vld [vmem:[%s1 + $0x40] sm:$0xf]
  %v48 = vld [vmem:[%s1 + $0x44] sm:$0xf]
  %v49 = vld [vmem:[%s1 + $0x48] sm:$0xf]
  %v50 = vld [vmem:[%s1 + $0x4c] sm:$0xf]
  %v51 = vld [vmem:[%s1 + $0x50] sm:$0xf]
  %v52 = vld [vmem:[%s1 + $0x54] sm:$0xf]
  %v53 = vld [vmem:[%s1 + $0x58] sm:$0xf]
  %v54 = vld [vmem:[%s1 + $0x5c] sm:$0xf]
  %v55 = vld [vmem:[%s1 + $0x60] sm:$0x3]
  %v72 = vunpack.c.l.b16 %v15
  %v73 = vunpack.c.h.b16 %v15
  %v74 = vunpack.c.l.b16 %v16
  %v75 = vunpack.c.h.b16 %v16
  %v76 = vunpack.c.l.b16 %v17
  %v77 = vunpack.c.h.b16 %v17
  %v78 = vunpack.c.l.b16 %v18
  %v79 = vunpack.c.h.b16 %v18
  %v80 = vunpack.c.l.b16 %v19
  %v81 = vunpack.c.h.b16 %v19
  %v82 = vunpack.c.l.b16 %v20
  %v83 = vunpack.c.h.b16 %v20
  %v84 = vunpack.c.l.b16 %v21
  %v85 = vunpack.c.h.b16 %v21
  %v86 = vunpack.c.l.b16 %v22
  %v87 = vunpack.c.h.b16 %v22
  %v88 = vunpack.c.l.b16 %v23
  %v89 = vunpack.c.h.b16 %v23
  %v90 = vunpack.c.l.b16 %v24
  %v91 = vunpack.c.h.b16 %v24
  %v92 = vunpack.c.l.b16 %v25
  %v93 = vunpack.c.h.b16 %v25
  %v94 = vunpack.c.l.b16 %v26
  %v95 = vunpack.c.h.b16 %v26
  %v96 = vunpack.c.l.b16 %v27
  %v97 = vunpack.c.h.b16 %v27
  %v98 = vunpack.c.l.b16 %v28
  %v99 = vunpack.c.h.b16 %v28
  %v100 = vunpack.c.l.b16 %v29
  %v101 = vunpack.c.h.b16 %v29
  %v102 = vunpack.c.l.b16 %v30
  %v103 = vunpack.c.h.b16 %v30
  %v104 = vpack.c.b16 %v74, %v72
  %v105 = vpack.c.b16 %v75, %v73
  %v106 = vpack.c.b16 %v78, %v76
  %v107 = vpack.c.b16 %v79, %v77
  %v108 = vpack.c.b16 %v82, %v80
  %v109 = vpack.c.b16 %v83, %v81
  %v110 = vpack.c.b16 %v86, %v84
  %v111 = vpack.c.b16 %v87, %v85
  %v112 = vpack.c.b16 %v90, %v88
  %v113 = vpack.c.b16 %v91, %v89
  %v114 = vpack.c.b16 %v94, %v92
  %v115 = vpack.c.b16 %v95, %v93
  %v116 = vpack.c.b16 %v98, %v96
  %v117 = vpack.c.b16 %v99, %v97
  %v118 = vpack.c.b16 %v102, %v100
  %v119 = vpack.c.b16 %v103, %v101
  %v153 = vunpack.c.l.b16 %v31
  %v154 = vunpack.c.l.b16 %v32
  %v155 = vunpack.c.l.b16 %v33
  %v156 = vunpack.c.l.b16 %v34
  %v157 = vunpack.c.l.b16 %v35
  %v158 = vunpack.c.l.b16 %v36
  %v159 = vunpack.c.l.b16 %v37
  %v160 = vunpack.c.l.b16 %v38
  %v161 = vunpack.c.l.b16 %v39
  %v162 = vunpack.c.l.b16 %v40
  %v163 = vunpack.c.l.b16 %v41
  %v164 = vunpack.c.l.b16 %v42
  %v165 = vunpack.c.l.b16 %v43
  %v166 = vunpack.c.l.b16 %v44
  %v167 = vunpack.c.l.b16 %v45
  %v168 = vunpack.c.l.b16 %v46
  %v169 = vunpack.c.l.b16 %v47
  %v170 = vunpack.c.l.b16 %v48
  %v171 = vunpack.c.l.b16 %v49
  %v172 = vunpack.c.l.b16 %v50
  %v173 = vunpack.c.l.b16 %v51
  %v174 = vunpack.c.l.b16 %v52
  %v175 = vunpack.c.l.b16 %v53
  %v176 = vunpack.c.l.b16 %v54
  %v177 = vunpack.c.l.b16 %v55
  %v178 = vpack.c.b16 %v154, %v153
  %v179 = vpack.c.b16 %v156, %v155
  %v180 = vpack.c.b16 %v158, %v157
  %v181 = vpack.c.b16 %v160, %v159
  %v182 = vpack.c.b16 %v162, %v161
  %v183 = vpack.c.b16 %v164, %v163
  %v184 = vpack.c.b16 %v166, %v165
  %v185 = vpack.c.b16 %v168, %v167
  %v186 = vpack.c.b16 %v170, %v169
  %v187 = vpack.c.b16 %v172, %v171
  %v188 = vpack.c.b16 %v174, %v173
  %v189 = vpack.c.b16 %v176, %v175
  %v190 = vpack.c.b16 %v177, %v177
  %vm203 = vcmask 556032
  %v205 = vsel %vm203, %v105, 0
  %v208 = vsel %vm203, %v107, 0
  %v211 = vsel %vm203, %v109, 0
  %v214 = vsel %vm203, %v111, 0
  %v217 = vsel %vm203, %v113, 0
  %v220 = vsel %vm203, %v115, 0
  %v223 = vsel %vm203, %v117, 0
  %v226 = vsel %vm203, %v119, 0
  %vm228 = vcmask 1041408
  %v230 = vsel %vm228, %v190, 0
  %232 = vmatprep.subr.bf16.mxu0 0
  %233 = vmatpush1.bf16.msra.mxu0 %v178
  %234 = vmatprep.subr.bf16.mxu0 0
  %235 = vmatpush1.bf16.msra.mxu0 %v179
  %236 = vmatprep.subr.bf16.mxu0 0
  %237 = vmatpush1.bf16.msra.mxu0 %v180
  %238 = vmatprep.subr.bf16.mxu0 0
  %239 = vmatpush1.bf16.msra.mxu0 %v181
  %240 = vmatprep.subr.bf16.mxu0 0
  %241 = vmatpush1.bf16.msra.mxu0 %v182
  %242 = vmatprep.subr.bf16.mxu0 0
  %243 = vmatpush1.bf16.msra.mxu0 %v183
  %244 = vmatprep.subr.bf16.mxu0 0
  %245 = vmatpush1.bf16.msra.mxu0 %v184
  %246 = vmatprep.subr.bf16.mxu0 0
  %247 = vmatpush1.bf16.msra.mxu0 %v185
  %248 = vmatprep.subr.bf16.mxu0 0
  %249 = vmatpush1.bf16.msra.mxu0 %v186
  %250 = vmatprep.subr.bf16.mxu0 0
  %251 = vmatpush1.bf16.msra.mxu0 %v187
  %252 = vmatprep.subr.bf16.mxu0 0
  %253 = vmatpush1.bf16.msra.mxu0 %v188
  %254 = vmatprep.subr.bf16.mxu0 0
  %255 = vmatpush1.bf16.msra.mxu0 %v189
  %256 = vmatprep.subr.bf16.mxu0 0
  %257 = vmatpush1.bf16.msra.mxu0 %v230
  %258 = vmatprep.subr.bf16.mxu0 0
  %259 = vmatpush1.bf16.msra.mxu0 0
  %260 = vmatprep.subr.bf16.mxu0 0
  %261 = vmatpush1.bf16.msra.mxu0 0
  %262 = vmatprep.subr.bf16.mxu0 0
  %263 = vmatpush1.bf16.msra.mxu0 0
  %264 = vmatprep.mubr.bf16.mxu0 %v205
  %265 = vmatmul.mubr.bf16.gmra.mrb[0].mxu0 %v104
  %v266 = vpop.f32.mrb[0].mxu0
  %v267 = vadd.f32 0.0, %v266
  %v268 = vpop.f32.mrb[0].mxu0
  %v269 = vpop.f32.mrb[0].mxu0
  %v270 = vadd.f32 0.0, %v269
  %v271 = vpop.f32.mrb[0].mxu0
  %272 = vmatprep.mubr.bf16.mxu0 %v208
  %273 = vmatmul.mubr.bf16.gmra.mrb[0].mxu0 %v106
  %v274 = vpop.f32.mrb[0].mxu0
  %v275 = vadd.f32 0.0, %v274
  %v276 = vpop.f32.mrb[0].mxu0
  %v277 = vpop.f32.mrb[0].mxu0
  %v278 = vadd.f32 0.0, %v277
  %v279 = vpop.f32.mrb[0].mxu0
  %280 = vmatprep.mubr.bf16.mxu0 %v211
  %281 = vmatmul.mubr.bf16.gmra.mrb[0].mxu0 %v108
  %v282 = vpop.f32.mrb[0].mxu0
  %v283 = vadd.f32 0.0, %v282
  %v284 = vpop.f32.mrb[0].mxu0
  %v285 = vpop.f32.mrb[0].mxu0
  %v286 = vadd.f32 0.0, %v285
  %v287 = vpop.f32.mrb[0].mxu0
  %288 = vmatprep.mubr.bf16.mxu0 %v214
  %289 = vmatmul.mubr.bf16.gmra.mrb[0].mxu0 %v110
  %v290 = vpop.f32.mrb[0].mxu0
  %v291 = vadd.f32 0.0, %v290
  %v292 = vpop.f32.mrb[0].mxu0
  %v293 = vpop.f32.mrb[0].mxu0
  %v294 = vadd.f32 0.0, %v293
  %v295 = vpop.f32.mrb[0].mxu0
  %296 = vmatprep.mubr.bf16.mxu0 %v217
  %297 = vmatmul.mubr.bf16.gmra.mrb[0].mxu0 %v112
  %v298 = vpop.f32.mrb[0].mxu0
  %v299 = vadd.f32 0.0, %v298
  %v300 = vpop.f32.mrb[0].mxu0
  %v301 = vpop.f32.mrb[0].mxu0
  %v302 = vadd.f32 0.0, %v301
  %v303 = vpop.f32.mrb[0].mxu0
  %304 = vmatprep.mubr.bf16.mxu0 %v220
  %305 = vmatmul.mubr.bf16.gmra.mrb[0].mxu0 %v114
  %v306 = vpop.f32.mrb[0].mxu0
  %v307 = vadd.f32 0.0, %v306
  %v308 = vpop.f32.mrb[0].mxu0
  %v309 = vpop.f32.mrb[0].mxu0
  %v310 = vadd.f32 0.0, %v309
  %v311 = vpop.f32.mrb[0].mxu0
  %312 = vmatprep.mubr.bf16.mxu0 %v223
  %313 = vmatmul.mubr.bf16.gmra.mrb[0].mxu0 %v116
  %v314 = vpop.f32.mrb[0].mxu0
  %v315 = vadd.f32 0.0, %v314
  %v316 = vpop.f32.mrb[0].mxu0
  %v317 = vpop.f32.mrb[0].mxu0
  %v318 = vadd.f32 0.0, %v317
  %v319 = vpop.f32.mrb[0].mxu0
  %320 = vmatprep.mubr.bf16.mxu0 %v226
  %321 = vmatmul.mubr.bf16.gmra.mrb[0].mxu0 %v118
  %v322 = vpop.f32.mrb[0].mxu0
  %v323 = vadd.f32 0.0, %v322
  %v324 = vpop.f32.mrb[0].mxu0
  %v325 = vpop.f32.mrb[0].mxu0
  %v326 = vadd.f32 0.0, %v325
  %v327 = vpop.f32.mrb[0].mxu0
  %328 = vdwg.mxu0
  %v329 = vadd.f32 %v267, %v270
  %v330 = vadd.f32 %v329, %v275
  %v331 = vadd.f32 %v330, %v278
  %v332 = vadd.f32 %v331, %v283
  %v333 = vadd.f32 %v332, %v286
  %v334 = vadd.f32 %v333, %v291
  %v335 = vadd.f32 %v334, %v294
  %v336 = vadd.f32 %v335, %v299
  %v337 = vadd.f32 %v336, %v302
  %v338 = vadd.f32 %v337, %v307
  %v339 = vadd.f32 %v338, %v310
  %v340 = vadd.f32 %v339, %v315
  %v341 = vadd.f32 %v340, %v318
  %v342 = vadd.f32 %v341, %v323
  %v343 = vadd.f32 %v342, %v326
  %v344 = vrot.slane %v343, 4
  %v345 = vadd.f32 %v343, %v344
  %v346 = vrot.slane %v345, 2
  %v347 = vadd.f32 %v345, %v346
  %v348 = vrot.slane %v347, 1
  %v349 = vadd.f32 %v347, %v348
  %350 = vst [vmem:[%s3] sm:$0x1] %v349
  %v351 = vmul.f32 %v267, %v267
  %v352 = vmul.f32 %v270, %v270
  %v353 = vmul.f32 %v275, %v275
  %v354 = vmul.f32 %v278, %v278
  %v355 = vmul.f32 %v283, %v283
  %v356 = vmul.f32 %v286, %v286
  %v357 = vmul.f32 %v291, %v291
  %v358 = vmul.f32 %v294, %v294
  %v359 = vmul.f32 %v299, %v299
  %v360 = vmul.f32 %v302, %v302
  %v361 = vmul.f32 %v307, %v307
  %v362 = vmul.f32 %v310, %v310
  %v363 = vmul.f32 %v315, %v315
  %v364 = vmul.f32 %v318, %v318
  %v365 = vmul.f32 %v323, %v323
  %v366 = vmul.f32 %v326, %v326
  %v367 = vadd.f32 %v351, %v352
  %v368 = vadd.f32 %v367, %v353
  %v369 = vadd.f32 %v368, %v354
  %v370 = vadd.f32 %v369, %v355
  %v371 = vadd.f32 %v370, %v356
  %v372 = vadd.f32 %v371, %v357
  %v373 = vadd.f32 %v372, %v358
  %v374 = vadd.f32 %v373, %v359
  %v375 = vadd.f32 %v374, %v360
  %v376 = vadd.f32 %v375, %v361
  %v377 = vadd.f32 %v376, %v362
  %v378 = vadd.f32 %v377, %v363
  %v379 = vadd.f32 %v378, %v364
  %v380 = vadd.f32 %v379, %v365
  %v381 = vadd.f32 %v380, %v366
  %v382 = vrot.slane %v381, 4
  %v383 = vadd.f32 %v381, %v382
  %v384 = vrot.slane %v383, 2
  %v385 = vadd.f32 %v383, %v384
  %v386 = vrot.slane %v385, 1
  %v387 = vadd.f32 %v385, %v386
  %388 = vst [vmem:[%s4] sm:$0x1] %v387
  %v389 = vpack.c.bf16 %v270, %v267
  %v390 = vpack.c.bf16 %v278, %v275
  %v391 = vpack.c.bf16 %v286, %v283
  %v392 = vpack.c.bf16 %v294, %v291
  %v393 = vpack.c.bf16 %v302, %v299
  %v394 = vpack.c.bf16 %v310, %v307
  %v395 = vpack.c.bf16 %v318, %v315
  %v396 = vpack.c.bf16 %v326, %v323
  %v405 = vunpack.c.l.b16 %v389
  %v406 = vunpack.c.h.b16 %v389
  %v407 = vunpack.c.l.b16 %v390
  %v408 = vunpack.c.h.b16 %v390
  %v409 = vunpack.c.l.b16 %v391
  %v410 = vunpack.c.h.b16 %v391
  %v411 = vunpack.c.l.b16 %v392
  %v412 = vunpack.c.h.b16 %v392
  %v413 = vunpack.c.l.b16 %v393
  %v414 = vunpack.c.h.b16 %v393
  %v415 = vunpack.c.l.b16 %v394
  %v416 = vunpack.c.h.b16 %v394
  %v417 = vunpack.c.l.b16 %v395
  %v418 = vunpack.c.h.b16 %v395
  %v419 = vunpack.c.l.b16 %v396
  %v420 = vunpack.c.h.b16 %v396
  %v421 = vpack.c.b16 %v405, %v405
  %v422 = vpack.c.b16 %v406, %v406
  %v423 = vpack.c.b16 %v407, %v407
  %v424 = vpack.c.b16 %v408, %v408
  %v425 = vpack.c.b16 %v409, %v409
  %v426 = vpack.c.b16 %v410, %v410
  %v427 = vpack.c.b16 %v411, %v411
  %v428 = vpack.c.b16 %v412, %v412
  %v429 = vpack.c.b16 %v413, %v413
  %v430 = vpack.c.b16 %v414, %v414
  %v431 = vpack.c.b16 %v415, %v415
  %v432 = vpack.c.b16 %v416, %v416
  %v433 = vpack.c.b16 %v417, %v417
  %v434 = vpack.c.b16 %v418, %v418
  %v435 = vpack.c.b16 %v419, %v419
  %v436 = vpack.c.b16 %v420, %v420
  %453 = vst [vmem:[%s2] sm:$0xf] %v421
  %454 = vst [vmem:[%s2 + $0x4] sm:$0xf] %v422
  %455 = vst [vmem:[%s2 + $0x8] sm:$0xf] %v423
  %456 = vst [vmem:[%s2 + $0xc] sm:$0xf] %v424
  %457 = vst [vmem:[%s2 + $0x10] sm:$0xf] %v425
  %458 = vst [vmem:[%s2 + $0x14] sm:$0xf] %v426
  %459 = vst [vmem:[%s2 + $0x18] sm:$0xf] %v427
  %460 = vst [vmem:[%s2 + $0x1c] sm:$0xf] %v428
  %461 = vst [vmem:[%s2 + $0x20] sm:$0xf] %v429
  %462 = vst [vmem:[%s2 + $0x24] sm:$0xf] %v430
  %463 = vst [vmem:[%s2 + $0x28] sm:$0xf] %v431
  %464 = vst [vmem:[%s2 + $0x2c] sm:$0xf] %v432
  %465 = vst [vmem:[%s2 + $0x30] sm:$0xf] %v433
  %466 = vst [vmem:[%s2 + $0x34] sm:$0xf] %v434
  %467 = vst [vmem:[%s2 + $0x38] sm:$0xf] %v435
  %468 = vst [vmem:[%s2 + $0x3c] sm:$0xf] %v436
  // Predicated region
  $region10: #{basic_down_sample.2} parent=0 // pred_check
    _
  $region11: #{basic_down_sample.2} parent=0 // pred_check_branch
    %470 = sbr.rel (0) target = $region13
  $region12: #{basic_down_sample.2} parent=0 // pred_region
    _
  $region13: #{basic_down_sample.2} parent=0 // pred_fallthru
    _
  // Predicated region
  $region14: #{basic_down_sample.2} parent=0 // pred_check
    _
  $region15: #{basic_down_sample.2} parent=0 // pred_check_branch
    %472 = sbr.rel (0) target = $region17
  $region16: #{basic_down_sample.2} parent=0 // pred_region
    _
  $region17: #{basic_down_sample.2} parent=0 // pred_fallthru
    _
  // Predicated region
  $region18: #{basic_down_sample.2} parent=0 // pred_check
    _
  $region19: #{basic_down_sample.2} parent=0 // pred_check_branch
    %474 = sbr.rel (0) target = $region21
  $region20: #{basic_down_sample.2} parent=0 // pred_region
    _
  $region21: #{basic_down_sample.2} parent=0 // pred_fallthru
    _
  // Predicated region
  $region22: #{basic_down_sample.2} parent=0 // pred_check
    _
  $region23: #{basic_down_sample.2} parent=0 // pred_check_branch
    %476 = sbr.rel (0) target = $region25
  $region24: #{basic_down_sample.2} parent=0 // pred_region
    _
  $region25: #{basic_down_sample.2} parent=0 // pred_fallthru
    _
  // Predicated region
  $region26: #{basic_down_sample.2} parent=0 // pred_check
    _
  $region27: #{basic_down_sample.2} parent=0 // pred_check_branch
    %478 = sbr.rel (0) target = $region29
  $region28: #{basic_down_sample.2} parent=0 // pred_region
    _
  $region29: #{basic_down_sample.2} parent=0 // pred_fallthru
    _
  // Predicated region
  $region30: #{basic_down_sample.2} parent=0 // pred_check
    _
  $region31: #{basic_down_sample.2} parent=0 // pred_check_branch
    %480 = sbr.rel (0) target = $region33
  $region32: #{basic_down_sample.2} parent=0 // pred_region
    _
  $region33: #{basic_down_sample.2} parent=0 // pred_fallthru
    _

// kernel: basic_down_sample.3
$region0: #{basic_down_sample.3}
  #allocation0 [shape = 'u32[]', space=smem, size = 0x4, offset = 0x4, fixed_abs, tag = 'smem constant byte address 0x4 - core index']
  #allocation1 [shape = 'u32[144,128]{1,0:T(1,128)}', space=vmem, size = 0x12000, scoped, tag = 'internal scratch']
  %s0 = inlined_call_operand.vmem [shape: bf16[2,110,128], index: 0, kind: input, shape index: {}]
  %s1 = inlined_call_operand.vmem [shape: bf16[9,128,128], index: 1, kind: input, shape index: {}]
  %s2 = inlined_call_operand.vmem [shape: f32[1,128], index: 2, kind: input, shape index: {}]
  %s3 = inlined_call_operand.vmem [shape: f32[2,80,128], index: 3, kind: output, shape index: {}]
  %s4 = sld [smem:[#allocation0]]
  $region45: #{basic_down_sample.3} parent=0
    _
  %s6 = ssub.s32 1, %s4
  %s7 = scalar_select 0, %s6, %s4
  loop: start=0, step=1, limit=4
  $region2: #{basic_down_sample.3} parent=0 // loop_pre_header
    _
  $region3: #{basic_down_sample.3} parent=0 // loop_header
    %s9 = sphi 0, %s13
    %p10 = scmp.ge.s32.totalorder %s9, 4
    %s16 = sphi 0, %s28
    %s17 = sphi 0, %s24
    %s18 = sphi 0, %s16
    %s19 = sphi 0, %s17
    %s20 = sphi 0, %s18
    %s21 = sphi 0, %s19
    %s31 = sphi 0, %s33
    %s34 = sphi 0, %s31
    %s35 = sphi 0, %s34
    %s51 = sphi 0, %s35
    %s55 = sphi 0, %s55
    %s57 = sphi 0, %s55
    %s58 = sphi 0, %s57
    %s72 = sphi 0, %s58
    %s76 = sphi 0, %s76
    %s78 = sphi 0, %s76
    %s79 = sphi 0, %s78
    %s93 = sphi 0, %s79
    %s101 = sphi 0, %s103
    %s104 = sphi 0, %s101
    %s105 = sphi 0, %s104
    %s121 = sphi 0, %s105
  $region4: #{basic_down_sample.3} parent=0 // loop_header_branch
    %12 = sbr.rel (%p10) target = $region8
  $region5: #{basic_down_sample.3} parent=0 // loop_body
    %s14 = ssub.s32 %s9, 1
    %s15 = ssub.s32 %s9, 2
    %s22 = sadd.s32 1, %s17
    %p23 = scmp.ge.s32.totalorder %s22, 1
    %s24 = scalar_select %p23, 0, %s22
    %s25 = sadd.s32 1, %s16
    %s26 = scalar_select %p23, %s25, %s16
    %p27 = scmp.ge.s32.totalorder %s26, 2
    %s28 = scalar_select %p27, 0, %s26
    %s29 = ssub.s32 %s16, %s28
    %p30 = scmp.eq.s32.totalorder %s29, 0
    %s32 = sadd.s32 %s31, 1
    %s33 = scalar_select %p30, %s31, %s32
    %p36 = pneg %p30
    %p37 = scmp.eq.s32.totalorder %s9, 1
    %p38 = por %p36, %p37
    %p39 = scmp.ne.s32.totalorder %s31, %s34
    %p40 = scmp.eq.s32.totalorder %s9, 0
    %p41 = por %p39, %p40
    %p42 = scmp.ne.s32.totalorder %s31, %s34
    %p43 = scmp.eq.s32.totalorder %s14, 1
    %p44 = por %p42, %p43
    %p45 = scmp.ne.s32.totalorder %s34, %s35
    %p46 = scmp.eq.s32.totalorder %s14, 0
    %p47 = por %p45, %p46
    %p48 = scmp.ne.s32.totalorder %s34, %s35
    %p49 = scmp.eq.s32.totalorder %s15, 1
    %p50 = por %p48, %p49
    %p52 = scmp.ne.s32.totalorder %s35, %s51
    %p53 = scmp.eq.s32.totalorder %s15, 0
    %p54 = por %p52, %p53
    %s56 = sadd.s32 %s55, 1
    %p59 = scmp.eq.s32.totalorder %s9, 1
    %p60 = scmp.ne.s32.totalorder %s55, %s57
    %p61 = scmp.eq.s32.totalorder %s9, 0
    %p62 = por %p60, %p61
    %p63 = scmp.ne.s32.totalorder %s55, %s57
    %p64 = scmp.eq.s32.totalorder %s14, 1
    %p65 = por %p63, %p64
    %p66 = scmp.ne.s32.totalorder %s57, %s58
    %p67 = scmp.eq.s32.totalorder %s14, 0
    %p68 = por %p66, %p67
    %p69 = scmp.ne.s32.totalorder %s57, %s58
    %p70 = scmp.eq.s32.totalorder %s15, 1
    %p71 = por %p69, %p70
    %p73 = scmp.ne.s32.totalorder %s58, %s72
    %p74 = scmp.eq.s32.totalorder %s15, 0
    %p75 = por %p73, %p74
    %s77 = sadd.s32 %s76, 1
    %p80 = scmp.eq.s32.totalorder %s9, 1
    %p81 = scmp.ne.s32.totalorder %s76, %s78
    %p82 = scmp.eq.s32.totalorder %s9, 0
    %p83 = por %p81, %p82
    %p84 = scmp.ne.s32.totalorder %s76, %s78
    %p85 = scmp.eq.s32.totalorder %s14, 1
    %p86 = por %p84, %p85
    %p87 = scmp.ne.s32.totalorder %s78, %s79
    %p88 = scmp.eq.s32.totalorder %s14, 0
    %p89 = por %p87, %p88
    %p90 = scmp.ne.s32.totalorder %s78, %s79
    %p91 = scmp.eq.s32.totalorder %s15, 1
    %p92 = por %p90, %p91
    %p94 = scmp.ne.s32.totalorder %s79, %s93
    %p95 = scmp.eq.s32.totalorder %s15, 0
    %p96 = por %p94, %p95
    %s97 = ssub.s32 %s16, %s28
    %s98 = ssub.s32 %s17, %s24
    %s99 = sor.u32 %s97, %s98
    %p100 = scmp.eq.s32.totalorder %s99, 0
    %s102 = sadd.s32 %s101, 1
    %s103 = scalar_select %p100, %s101, %s102
    %p106 = pneg %p100
    %p107 = scmp.eq.s32.totalorder %s9, 1
    %p108 = por %p106, %p107
    %p109 = scmp.ne.s32.totalorder %s101, %s104
    %p110 = scmp.eq.s32.totalorder %s9, 0
    %p111 = por %p109, %p110
    %p112 = scmp.ne.s32.totalorder %s101, %s104
    %p113 = scmp.eq.s32.totalorder %s14, 1
    %p114 = por %p112, %p113
    %p115 = scmp.ne.s32.totalorder %s104, %s105
    %p116 = scmp.eq.s32.totalorder %s14, 0
    %p117 = por %p115, %p116
    %p118 = scmp.ne.s32.totalorder %s104, %s105
    %p119 = scmp.eq.s32.totalorder %s15, 1
    %p120 = por %p118, %p119
    %p122 = scmp.ne.s32.totalorder %s105, %s121
    %p123 = scmp.eq.s32.totalorder %s15, 0
    %p124 = por %p122, %p123
    %p125 = scmp.le.s32.totalorder 1, %s9
    %p126 = scmp.lt.s32.totalorder %s9, 3
    %p127 = pnand %p125, %p126
    %p128 = pneg %p127
    // Predicated region
    $region9: #{basic_down_sample.3} parent=5 // pred_check
      _
    $region10: #{basic_down_sample.3} parent=5 // pred_check_branch
      %130 = sbr.rel (%p127) target = $region12
    $region11: #{basic_down_sample.3} parent=5 // pred_region
      %s131 = ssub.s32 %s9, 1
      // Predicated region
      $region13: #{basic_down_sample.3} parent=11 // pred_check
        %p132 = pneg %p68
      $region14: #{basic_down_sample.3} parent=11 // pred_check_branch
        %134 = sbr.rel (%p132) target = $region16
      $region15: #{basic_down_sample.3} parent=11 // pred_region
        _
      $region16: #{basic_down_sample.3} parent=11 // pred_fallthru
        _
      // Predicated region
      $region17: #{basic_down_sample.3} parent=11 // pred_check
        %p135 = pneg %p89
      $region18: #{basic_down_sample.3} parent=11 // pred_check_branch
        %137 = sbr.rel (%p135) target = $region20
      $region19: #{basic_down_sample.3} parent=11 // pred_region
        _
      $region20: #{basic_down_sample.3} parent=11 // pred_fallthru
        _
    $region12: #{basic_down_sample.3} parent=5 // pred_fallthru
      _
    %p138 = scmp.lt.s32.totalorder %s9, 2
    // Predicated region
    $region21: #{basic_down_sample.3} parent=5 // pred_check
      %p139 = pneg %p138
    $region22: #{basic_down_sample.3} parent=5 // pred_check_branch
      %141 = sbr.rel (%p139) target = $region24
    $region23: #{basic_down_sample.3} parent=5 // pred_region
      // Predicated region
      $region25: #{basic_down_sample.3} parent=23 // pred_check
        %p142 = pneg %p41
      $region26: #{basic_down_sample.3} parent=23 // pred_check_branch
        %144 = sbr.rel (%p142) target = $region28
      $region27: #{basic_down_sample.3} parent=23 // pred_region
        %p145 = scmp.lt.s32.totalorder %s16, 1
        %s146 = scalar_select %p145, %s16, 1
        %s147 = smul.addr %s146, 14
        %s148 = smul.addr %s147, 4
        %s149 = scalar_lea.vmem %s0, %s148
      $region28: #{basic_down_sample.3} parent=23 // pred_fallthru
        _
    $region24: #{basic_down_sample.3} parent=5 // pred_fallthru
      _
    %p150 = scmp.le.s32.totalorder 1, %s9
    %p151 = scmp.lt.s32.totalorder %s9, 3
    %p152 = pnand %p150, %p151
    %p153 = pneg %p152
    // Predicated region
    $region29: #{basic_down_sample.3} parent=5 // pred_check
      _
    $region30: #{basic_down_sample.3} parent=5 // pred_check_branch
      %155 = sbr.rel (%p152) target = $region32
    $region31: #{basic_down_sample.3} parent=5 // pred_region
      %s156 = ssub.s32 %s9, 1
      %p157 = scmp.lt.s32.totalorder %s18, 1
      %s158 = scalar_select %p157, %s18, 1
      %s159 = smul.addr %s158, 14
      %s160 = smul.addr %s159, 4
      %s161 = scalar_lea.vmem %s0, %s160
      %p162 = pneg %p47
      %p163 = pneg %p44
      %p164 = pneg %p68
      %p165 = pneg %p65
      %p166 = pneg %p89
      %p167 = pneg %p86
      %p168 = pneg %p117
      %p169 = pneg %p114
      %s170 = smul.u32 10, %s19
      %p171 = scmp.lt.s32.totalorder %s18, 1
      %s172 = scalar_select %p171, %s18, 1
      %p173 = scmp.lt.s32.totalorder %s170, 9
      %s174 = scalar_select %p173, %s170, 9
      %s175 = smul.addr %s172, 10
      %s176 = sadd.s32 %s174, %s175
      %s177 = smul.addr %s176, 8
      %s178 = scalar_lea.vmem %s3, %s177
      %p179 = scmp.lt.s32.totalorder %s18, 1
      %s180 = scalar_select %p179, %s18, 1
      %s181 = smul.addr %s180, 14
      %s182 = smul.addr %s181, 4
      %s183 = scalar_lea.vmem %s0, %s182
      %s184 = smul.u32 10, %s19
      %p185 = scmp.lt.s32.totalorder %s18, 1
      %s186 = scalar_select %p185, %s18, 1
      %p187 = scmp.lt.s32.totalorder %s184, 9
      %s188 = scalar_select %p187, %s184, 9
      %s189 = smul.addr %s186, 10
      %s190 = sadd.s32 %s188, %s189
      %s191 = smul.addr %s190, 8
      %s192 = scalar_lea.vmem %s3, %s191
      %s193 = smul.u32 10, %s19
      %v195 = vld [vmem:[%s183] sm:$0xf]
      %v196 = vld [vmem:[%s183 + $0x4] sm:$0xf]
      %v197 = vld [vmem:[%s183 + $0x8] sm:$0xf]
      %v198 = vld [vmem:[%s183 + $0xc] sm:$0xf]
      %v199 = vld [vmem:[%s183 + $0x10] sm:$0xf]
      %v200 = vld [vmem:[%s183 + $0x14] sm:$0xf]
      %v201 = vld [vmem:[%s183 + $0x18] sm:$0xf]
      %v202 = vld [vmem:[%s183 + $0x1c] sm:$0xf]
      %v203 = vld [vmem:[%s183 + $0x20] sm:$0xf]
      %v204 = vld [vmem:[%s183 + $0x24] sm:$0xf]
      %v205 = vld [vmem:[%s1] sm:$0xf]
      %v206 = vld [vmem:[%s1 + $0x4] sm:$0xf]
      %v207 = vld [vmem:[%s1 + $0x8] sm:$0xf]
      %v208 = vld [vmem:[%s1 + $0xc] sm:$0xf]
      %v209 = vld [vmem:[%s1 + $0x10] sm:$0xf]
      %v210 = vld [vmem:[%s1 + $0x14] sm:$0xf]
      %v211 = vld [vmem:[%s1 + $0x18] sm:$0xf]
      %v212 = vld [vmem:[%s1 + $0x1c] sm:$0xf]
      %v213 = vld [vmem:[%s1 + $0x20] sm:$0xf]
      %v214 = vld [vmem:[%s1 + $0x24] sm:$0xf]
      %v215 = vld [vmem:[%s1 + $0x28] sm:$0xf]
      %v216 = vld [vmem:[%s1 + $0x2c] sm:$0xf]
      %v217 = vld [vmem:[%s1 + $0x30] sm:$0xf]
      %v218 = vld [vmem:[%s1 + $0x34] sm:$0xf]
      %v219 = vld [vmem:[%s1 + $0x38] sm:$0xf]
      %v220 = vld [vmem:[%s1 + $0x3c] sm:$0xf]
      %v221 = vld [vmem:[%s183 + $0x28] sm:$0x1]
      %s222 = scalar_lea.vmem %s1, 64
      %v223 = vld [vmem:[%s222] sm:$0xf]
      %v224 = vld [vmem:[%s222 + $0x4] sm:$0xf]
      %v225 = vld [vmem:[%s222 + $0x8] sm:$0xf]
      %v226 = vld [vmem:[%s222 + $0xc] sm:$0xf]
      %v227 = vld [vmem:[%s222 + $0x10] sm:$0xf]
      %v228 = vld [vmem:[%s222 + $0x14] sm:$0xf]
      %v229 = vld [vmem:[%s222 + $0x18] sm:$0xf]
      %v230 = vld [vmem:[%s222 + $0x1c] sm:$0xf]
      %v231 = vld [vmem:[%s222 + $0x20] sm:$0xf]
      %v232 = vld [vmem:[%s222 + $0x24] sm:$0xf]
      %v233 = vld [vmem:[%s222 + $0x28] sm:$0xf]
      %v234 = vld [vmem:[%s222 + $0x2c] sm:$0xf]
      %v235 = vld [vmem:[%s222 + $0x30] sm:$0xf]
      %v236 = vld [vmem:[%s222 + $0x34] sm:$0xf]
      %v237 = vld [vmem:[%s222 + $0x38] sm:$0xf]
      %v238 = vld [vmem:[%s222 + $0x3c] sm:$0xf]
      %v250 = vunpack.c.l.b16 %v195
      %v251 = vunpack.c.l.b16 %v196
      %v252 = vunpack.c.l.b16 %v197
      %v253 = vunpack.c.l.b16 %v198
      %v254 = vunpack.c.l.b16 %v199
      %v255 = vunpack.c.l.b16 %v200
      %v256 = vunpack.c.l.b16 %v201
      %v257 = vunpack.c.l.b16 %v202
      %v258 = vunpack.c.l.b16 %v203
      %v259 = vunpack.c.l.b16 %v204
      %v260 = vunpack.c.l.b16 %v221
      %v261 = vpack.c.b16 %v251, %v250
      %v262 = vpack.c.b16 %v253, %v252
      %v263 = vpack.c.b16 %v255, %v254
      %v264 = vpack.c.b16 %v257, %v256
      %v265 = vpack.c.b16 %v259, %v258
      %v266 = vpack.c.b16 %v260, %v260
      %vm267 = vsmask.f32 7424
      %v269 = vshrl.u32 %v261, 16
      %v271 = vshll.u32 %v261, 16
      %v273 = vrot.slane %v271, 1
      %v274 = vor.u32 %v269, %v273
      %v276 = vshll.u32 %v262, 16
      %v278 = vrot.slane %v276, 1
      %v279 = vsel %vm267, %v274, %v278
      %v280 = vshrl.u32 %v262, 16
      %v282 = vor.u32 %v280, %v278
      %v284 = vshll.u32 %v263, 16
      %v286 = vrot.slane %v284, 1
      %v287 = vsel %vm267, %v282, %v286
      %v288 = vshrl.u32 %v263, 16
      %v290 = vor.u32 %v288, %v286
      %v292 = vshll.u32 %v264, 16
      %v294 = vrot.slane %v292, 1
      %v295 = vsel %vm267, %v290, %v294
      %v296 = vshrl.u32 %v264, 16
      %v298 = vor.u32 %v296, %v294
      %v300 = vshll.u32 %v265, 16
      %v302 = vrot.slane %v300, 1
      %v303 = vsel %vm267, %v298, %v302
      %v304 = vshrl.u32 %v265, 16
      %v306 = vor.u32 %v304, %v302
      %v308 = vshll.u32 %v266, 16
      %v310 = vrot.slane %v308, 1
      %v311 = vsel %vm267, %v306, %v310
      %v333 = vunpack.c.l.b16 %v223
      %v334 = vunpack.c.l.b16 %v224
      %v335 = vunpack.c.l.b16 %v225
      %v336 = vunpack.c.l.b16 %v226
      %v337 = vunpack.c.l.b16 %v227
      %v338 = vunpack.c.l.b16 %v228
      %v339 = vunpack.c.l.b16 %v229
      %v340 = vunpack.c.l.b16 %v230
      %v341 = vunpack.c.l.b16 %v231
      %v342 = vunpack.c.l.b16 %v232
      %v343 = vunpack.c.l.b16 %v233
      %v344 = vunpack.c.l.b16 %v234
      %v345 = vunpack.c.l.b16 %v235
      %v346 = vunpack.c.l.b16 %v236
      %v347 = vunpack.c.l.b16 %v237
      %v348 = vunpack.c.l.b16 %v238
      %v349 = vpack.c.b16 %v334, %v333
      %v350 = vpack.c.b16 %v336, %v335
      %v351 = vpack.c.b16 %v338, %v337
      %v352 = vpack.c.b16 %v340, %v339
      %v353 = vpack.c.b16 %v342, %v341
      %v354 = vpack.c.b16 %v344, %v343
      %v355 = vpack.c.b16 %v346, %v345
      %v356 = vpack.c.b16 %v348, %v347
      %365 = vmatprep.subr.bf16.mxu0 0
      %366 = vmatpush1.bf16.msra.mxu0 %v349
      %367 = vmatprep.subr.bf16.mxu0 0
      %368 = vmatpush1.bf16.msra.mxu0 %v350
      %369 = vmatprep.subr.bf16.mxu0 0
      %370 = vmatpush1.bf16.msra.mxu0 %v351
      %371 = vmatprep.subr.bf16.mxu0 0
      %372 = vmatpush1.bf16.msra.mxu0 %v352
      %373 = vmatprep.subr.bf16.mxu0 0
      %374 = vmatpush1.bf16.msra.mxu0 %v353
      %375 = vmatprep.subr.bf16.mxu0 0
      %376 = vmatpush1.bf16.msra.mxu0 %v354
      %377 = vmatprep.subr.bf16.mxu0 0
      %378 = vmatpush1.bf16.msra.mxu0 %v355
      %379 = vmatprep.subr.bf16.mxu0 0
      %380 = vmatpush1.bf16.msra.mxu0 %v356
      %381 = vmatprep.subr.bf16.mxu0 0
      %382 = vmatpush1.bf16.msra.mxu0 0
      %383 = vmatprep.subr.bf16.mxu0 0
      %384 = vmatpush1.bf16.msra.mxu0 0
      %385 = vmatprep.subr.bf16.mxu0 0
      %386 = vmatpush1.bf16.msra.mxu0 0
      %387 = vmatprep.subr.bf16.mxu0 0
      %388 = vmatpush1.bf16.msra.mxu0 0
      %389 = vmatprep.subr.bf16.mxu0 0
      %390 = vmatpush1.bf16.msra.mxu0 0
      %391 = vmatprep.subr.bf16.mxu0 0
      %392 = vmatpush1.bf16.msra.mxu0 0
      %393 = vmatprep.subr.bf16.mxu0 0
      %394 = vmatpush1.bf16.msra.mxu0 0
      %395 = vmatprep.subr.bf16.mxu0 0
      %396 = vmatpush1.bf16.msra.mxu0 0
      %397 = vmatprep.mubr.bf16.mxu0 0
      %398 = vmatmul.mubr.bf16.gmra.mrb[0].mxu0 %v279
      %v399 = vpop.f32.mrb[0].mxu0
      %v400 = vadd.f32 0.0, %v399
      %v401 = vpop.f32.mrb[0].mxu0
      %v402 = vpop.f32.mrb[0].mxu0
      %v403 = vadd.f32 0.0, %v402
      %v404 = vpop.f32.mrb[0].mxu0
      %405 = vmatprep.mubr.bf16.mxu0 0
      %406 = vmatmul.mubr.bf16.gmra.mrb[0].mxu0 %v287
      %v407 = vpop.f32.mrb[0].mxu0
      %v408 = vadd.f32 0.0, %v407
      %v409 = vpop.f32.mrb[0].mxu0
      %v410 = vpop.f32.mrb[0].mxu0
      %v411 = vadd.f32 0.0, %v410
      %v412 = vpop.f32.mrb[0].mxu0
      %413 = vmatprep.mubr.bf16.mxu0 0
      %414 = vmatmul.mubr.bf16.gmra.mrb[0].mxu0 %v295
      %v415 = vpop.f32.mrb[0].mxu0
      %v416 = vadd.f32 0.0, %v415
      %v417 = vpop.f32.mrb[0].mxu0
      %v418 = vpop.f32.mrb[0].mxu0
      %v419 = vadd.f32 0.0, %v418
      %v420 = vpop.f32.mrb[0].mxu0
      %421 = vmatprep.mubr.bf16.mxu0 0
      %422 = vmatmul.mubr.bf16.gmra.mrb[0].mxu0 %v303
      %v423 = vpop.f32.mrb[0].mxu0
      %v424 = vadd.f32 0.0, %v423
      %v425 = vpop.f32.mrb[0].mxu0
      %v426 = vpop.f32.mrb[0].mxu0
      %v427 = vadd.f32 0.0, %v426
      %v428 = vpop.f32.mrb[0].mxu0
      %429 = vmatprep.mubr.bf16.mxu0 0
      %430 = vmatmul.mubr.bf16.gmra.mrb[0].mxu0 %v311
      %v431 = vpop.f32.mrb[0].mxu0
      %v432 = vadd.f32 0.0, %v431
      %v433 = vpop.f32.mrb[0].mxu0
      %v434 = vpop.f32.mrb[0].mxu0
      %v435 = vadd.f32 0.0, %v434
      %v436 = vpop.f32.mrb[0].mxu0
      %437 = vdwg.mxu0
      %v459 = vunpack.c.l.b16 %v205
      %v460 = vunpack.c.l.b16 %v206
      %v461 = vunpack.c.l.b16 %v207
      %v462 = vunpack.c.l.b16 %v208
      %v463 = vunpack.c.l.b16 %v209
      %v464 = vunpack.c.l.b16 %v210
      %v465 = vunpack.c.l.b16 %v211
      %v466 = vunpack.c.l.b16 %v212
      %v467 = vunpack.c.l.b16 %v213
      %v468 = vunpack.c.l.b16 %v214
      %v469 = vunpack.c.l.b16 %v215
      %v470 = vunpack.c.l.b16 %v216
      %v471 = vunpack.c.l.b16 %v217
      %v472 = vunpack.c.l.b16 %v218
      %v473 = vunpack.c.l.b16 %v219
      %v474 = vunpack.c.l.b16 %v220
      %v475 = vpack.c.b16 %v460, %v459
      %v476 = vpack.c.b16 %v462, %v461
      %v477 = vpack.c.b16 %v464, %v463
      %v478 = vpack.c.b16 %v466, %v465
      %v479 = vpack.c.b16 %v468, %v467
      %v480 = vpack.c.b16 %v470, %v469
      %v481 = vpack.c.b16 %v472, %v471
      %v482 = vpack.c.b16 %v474, %v473
      %491 = vmatprep.subr.bf16.mxu0 0
      %492 = vmatpush1.bf16.msra.mxu0 %v475
      %493 = vmatprep.subr.bf16.mxu0 0
      %494 = vmatpush1.bf16.msra.mxu0 %v476
      %495 = vmatprep.subr.bf16.mxu0 0
      %496 = vmatpush1.bf16.msra.mxu0 %v477
      %497 = vmatprep.subr.bf16.mxu0 0
      %498 = vmatpush1.bf16.msra.mxu0 %v478
      %499 = vmatprep.subr.bf16.mxu0 0
      %500 = vmatpush1.bf16.msra.mxu0 %v479
      %501 = vmatprep.subr.bf16.mxu0 0
      %502 = vmatpush1.bf16.msra.mxu0 %v480
      %503 = vmatprep.subr.bf16.mxu0 0
      %504 = vmatpush1.bf16.msra.mxu0 %v481
      %505 = vmatprep.subr.bf16.mxu0 0
      %506 = vmatpush1.bf16.msra.mxu0 %v482
      %507 = vmatprep.subr.bf16.mxu0 0
      %508 = vmatpush1.bf16.msra.mxu0 0
      %509 = vmatprep.subr.bf16.mxu0 0
      %510 = vmatpush1.bf16.msra.mxu0 0
      %511 = vmatprep.subr.bf16.mxu0 0
      %512 = vmatpush1.bf16.msra.mxu0 0
      %513 = vmatprep.subr.bf16.mxu0 0
      %514 = vmatpush1.bf16.msra.mxu0 0
      %515 = vmatprep.subr.bf16.mxu0 0
      %516 = vmatpush1.bf16.msra.mxu0 0
      %517 = vmatprep.subr.bf16.mxu0 0
      %518 = vmatpush1.bf16.msra.mxu0 0
      %519 = vmatprep.subr.bf16.mxu0 0
      %520 = vmatpush1.bf16.msra.mxu0 0
      %521 = vmatprep.subr.bf16.mxu0 0
      %522 = vmatpush1.bf16.msra.mxu0 0
      %523 = vmatprep.mubr.bf16.mxu0 0
      %524 = vmatmul.mubr.bf16.gmra.mrb[0].mxu0 %v261
      %v525 = vpop.f32.mrb[0].mxu0
      %v526 = vadd.f32 %v400, %v525
      %v527 = vpop.f32.mrb[0].mxu0
      %v528 = vpop.f32.mrb[0].mxu0
      %v529 = vadd.f32 %v403, %v528
      %v530 = vpop.f32.mrb[0].mxu0
      %531 = vmatprep.mubr.bf16.mxu0 0
      %532 = vmatmul.mubr.bf16.gmra.mrb[0].mxu0 %v262
      %v533 = vpop.f32.mrb[0].mxu0
      %v534 = vadd.f32 %v408, %v533
      %v535 = vpop.f32.mrb[0].mxu0
      %v536 = vpop.f32.mrb[0].mxu0
      %v537 = vadd.f32 %v411, %v536
      %v538 = vpop.f32.mrb[0].mxu0
      %539 = vmatprep.mubr.bf16.mxu0 0
      %540 = vmatmul.mubr.bf16.gmra.mrb[0].mxu0 %v263
      %v541 = vpop.f32.mrb[0].mxu0
      %v542 = vadd.f32 %v416, %v541
      %v543 = vpop.f32.mrb[0].mxu0
      %v544 = vpop.f32.mrb[0].mxu0
      %v545 = vadd.f32 %v419, %v544
      %v546 = vpop.f32.mrb[0].mxu0
      %547 = vmatprep.mubr.bf16.mxu0 0
      %548 = vmatmul.mubr.bf16.gmra.mrb[0].mxu0 %v264
      %v549 = vpop.f32.mrb[0].mxu0
      %v550 = vadd.f32 %v424, %v549
      %v551 = vpop.f32.mrb[0].mxu0
      %v552 = vpop.f32.mrb[0].mxu0
      %v553 = vadd.f32 %v427, %v552
      %v554 = vpop.f32.mrb[0].mxu0
      %555 = vmatprep.mubr.bf16.mxu0 0
      %556 = vmatmul.mubr.bf16.gmra.mrb[0].mxu0 %v265
      %v557 = vpop.f32.mrb[0].mxu0
      %v558 = vadd.f32 %v432, %v557
      %v559 = vpop.f32.mrb[0].mxu0
      %v560 = vpop.f32.mrb[0].mxu0
      %v561 = vadd.f32 %v435, %v560
      %v562 = vpop.f32.mrb[0].mxu0
      %563 = vdwg.mxu0
      %v564 = vld [vmem:[%s183] sm:$0xe]
      %s565 = scalar_lea.vmem %s1, 128
      %v566 = vld [vmem:[%s565] sm:$0xf]
      %v567 = vld [vmem:[%s565 + $0x4] sm:$0xf]
      %v568 = vld [vmem:[%s565 + $0x8] sm:$0xf]
      %v569 = vld [vmem:[%s565 + $0xc] sm:$0xf]
      %v570 = vld [vmem:[%s565 + $0x10] sm:$0xf]
      %v571 = vld [vmem:[%s565 + $0x14] sm:$0xf]
      %v572 = vld [vmem:[%s565 + $0x18] sm:$0xf]
      %v573 = vld [vmem:[%s565 + $0x1c] sm:$0xf]
      %v574 = vld [vmem:[%s565 + $0x20] sm:$0xf]
      %v575 = vld [vmem:[%s565 + $0x24] sm:$0xf]
      %v576 = vld [vmem:[%s565 + $0x28] sm:$0xf]
      %v577 = vld [vmem:[%s565 + $0x2c] sm:$0xf]
      %v578 = vld [vmem:[%s565 + $0x30] sm:$0xf]
      %v579 = vld [vmem:[%s565 + $0x34] sm:$0xf]
      %v580 = vld [vmem:[%s565 + $0x38] sm:$0xf]
      %v581 = vld [vmem:[%s565 + $0x3c] sm:$0xf]
      %v583 = vunpack.c.l.b16 %v564
      %v584 = vpack.c.b16 %v251, %v583
      %vm585 = vcmask 1046528
      %v586 = vrot.slane %v584, 1
      %v587 = vrot.slane %v262, 1
      %v588 = vsel %vm585, %v586, %v587
      %v589 = vrot.slane %v263, 1
      %v590 = vsel %vm585, %v587, %v589
      %v591 = vrot.slane %v264, 1
      %v592 = vsel %vm585, %v589, %v591
      %v593 = vrot.slane %v265, 1
      %v594 = vsel %vm585, %v591, %v593
      %v595 = vrot.slane %v266, 1
      %v596 = vsel %vm585, %v593, %v595
      %v618 = vunpack.c.l.b16 %v566
      %v619 = vunpack.c.l.b16 %v567
      %v620 = vunpack.c.l.b16 %v568
      %v621 = vunpack.c.l.b16 %v569
      %v622 = vunpack.c.l.b16 %v570
      %v623 = vunpack.c.l.b16 %v571
      %v624 = vunpack.c.l.b16 %v572
      %v625 = vunpack.c.l.b16 %v573
      %v626 = vunpack.c.l.b16 %v574
      %v627 = vunpack.c.l.b16 %v575
      %v628 = vunpack.c.l.b16 %v576
      %v629 = vunpack.c.l.b16 %v577
      %v630 = vunpack.c.l.b16 %v578
      %v631 = vunpack.c.l.b16 %v579
      %v632 = vunpack.c.l.b16 %v580
      %v633 = vunpack.c.l.b16 %v581
      %v634 = vpack.c.b16 %v619, %v618
      %v635 = vpack.c.b16 %v621, %v620
      %v636 = vpack.c.b16 %v623, %v622
      %v637 = vpack.c.b16 %v625, %v624
      %v638 = vpack.c.b16 %v627, %v626
      %v639 = vpack.c.b16 %v629, %v628
      %v640 = vpack.c.b16 %v631, %v630
      %v641 = vpack.c.b16 %v633, %v632
      %650 = vmatprep.subr.bf16.mxu0 0
      %651 = vmatpush1.bf16.msra.mxu0 %v634
      %652 = vmatprep.subr.bf16.mxu0 0
      %653 = vmatpush1.bf16.msra.mxu0 %v635
      %654 = vmatprep.subr.bf16.mxu0 0
      %655 = vmatpush1.bf16.msra.mxu0 %v636
      %656 = vmatprep.subr.bf16.mxu0 0
      %657 = vmatpush1.bf16.msra.mxu0 %v637
      %658 = vmatprep.subr.bf16.mxu0 0
      %659 = vmatpush1.bf16.msra.mxu0 %v638
      %660 = vmatprep.subr.bf16.mxu0 0
      %661 = vmatpush1.bf16.msra.mxu0 %v639
      %662 = vmatprep.subr.bf16.mxu0 0
      %663 = vmatpush1.bf16.msra.mxu0 %v640
      %664 = vmatprep.subr.bf16.mxu0 0
      %665 = vmatpush1.bf16.msra.mxu0 %v641
      %666 = vmatprep.subr.bf16.mxu0 0
      %667 = vmatpush1.bf16.msra.mxu0 0
      %668 = vmatprep.subr.bf16.mxu0 0
      %669 = vmatpush1.bf16.msra.mxu0 0
      %670 = vmatprep.subr.bf16.mxu0 0
      %671 = vmatpush1.bf16.msra.mxu0 0
      %672 = vmatprep.subr.bf16.mxu0 0
      %673 = vmatpush1.bf16.msra.mxu0 0
      %674 = vmatprep.subr.bf16.mxu0 0
      %675 = vmatpush1.bf16.msra.mxu0 0
      %676 = vmatprep.subr.bf16.mxu0 0
      %677 = vmatpush1.bf16.msra.mxu0 0
      %678 = vmatprep.subr.bf16.mxu0 0
      %679 = vmatpush1.bf16.msra.mxu0 0
      %680 = vmatprep.subr.bf16.mxu0 0
      %681 = vmatpush1.bf16.msra.mxu0 0
      %682 = vmatprep.mubr.bf16.mxu0 0
      %683 = vmatmul.mubr.bf16.gmra.mrb[0].mxu0 %v588
      %v684 = vpop.f32.mrb[0].mxu0
      %v685 = vadd.f32 0.0, %v684
      %v686 = vpop.f32.mrb[0].mxu0
      %v687 = vpop.f32.mrb[0].mxu0
      %v688 = vadd.f32 0.0, %v687
      %v689 = vpop.f32.mrb[0].mxu0
      %690 = vmatprep.mubr.bf16.mxu0 0
      %691 = vmatmul.mubr.bf16.gmra.mrb[0].mxu0 %v590
      %v692 = vpop.f32.mrb[0].mxu0
      %v693 = vadd.f32 0.0, %v692
      %v694 = vpop.f32.mrb[0].mxu0
      %v695 = vpop.f32.mrb[0].mxu0
      %v696 = vadd.f32 0.0, %v695
      %v697 = vpop.f32.mrb[0].mxu0
      %698 = vmatprep.mubr.bf16.mxu0 0
      %699 = vmatmul.mubr.bf16.gmra.mrb[0].mxu0 %v592
      %v700 = vpop.f32.mrb[0].mxu0
      %v701 = vadd.f32 0.0, %v700
      %v702 = vpop.f32.mrb[0].mxu0
      %v703 = vpop.f32.mrb[0].mxu0
      %v704 = vadd.f32 0.0, %v703
      %v705 = vpop.f32.mrb[0].mxu0
      %706 = vmatprep.mubr.bf16.mxu0 0
      %707 = vmatmul.mubr.bf16.gmra.mrb[0].mxu0 %v594
      %v708 = vpop.f32.mrb[0].mxu0
      %v709 = vadd.f32 0.0, %v708
      %v710 = vpop.f32.mrb[0].mxu0
      %v711 = vpop.f32.mrb[0].mxu0
      %v712 = vadd.f32 0.0, %v711
      %v713 = vpop.f32.mrb[0].mxu0
      %714 = vmatprep.mubr.bf16.mxu0 0
      %715 = vmatmul.mubr.bf16.gmra.mrb[0].mxu0 %v596
      %v716 = vpop.f32.mrb[0].mxu0
      %v717 = vadd.f32 0.0, %v716
      %v718 = vpop.f32.mrb[0].mxu0
      %v719 = vpop.f32.mrb[0].mxu0
      %v720 = vadd.f32 0.0, %v719
      %v721 = vpop.f32.mrb[0].mxu0
      %722 = vdwg.mxu0
      %v723 = vadd.f32 %v526, %v685
      %v724 = vadd.f32 %v529, %v688
      %v725 = vadd.f32 %v534, %v693
      %v726 = vadd.f32 %v537, %v696
      %v727 = vadd.f32 %v542, %v701
      %v728 = vadd.f32 %v545, %v704
      %v729 = vadd.f32 %v550, %v709
      %v730 = vadd.f32 %v553, %v712
      %v731 = vadd.f32 %v558, %v717
      %v732 = vadd.f32 %v561, %v720
      %v733 = vld [vmem:[%s183 + $0x4] sm:$0xe]
      %v734 = vld [vmem:[%s183 + $0x8] sm:$0xf]
      %v735 = vld [vmem:[%s183 + $0xc] sm:$0xf]
      %v736 = vld [vmem:[%s183 + $0x10] sm:$0xf]
      %v737 = vld [vmem:[%s183 + $0x14] sm:$0xf]
      %v738 = vld [vmem:[%s183 + $0x18] sm:$0xf]
      %v739 = vld [vmem:[%s183 + $0x1c] sm:$0xf]
      %v740 = vld [vmem:[%s183 + $0x20] sm:$0xf]
      %v741 = vld [vmem:[%s183 + $0x24] sm:$0xf]
      %v742 = vld [vmem:[%s183 + $0x28] sm:$0xf]
      %v743 = vld [vmem:[%s183 + $0x2c] sm:$0x1]
      %s744 = scalar_lea.vmem %s1, 192
      %v745 = vld [vmem:[%s744] sm:$0xf]
      %v746 = vld [vmem:[%s744 + $0x4] sm:$0xf]
      %v747 = vld [vmem:[%s744 + $0x8] sm:$0xf]
      %v748 = vld [vmem:[%s744 + $0xc] sm:$0xf]
      %v749 = vld [vmem:[%s744 + $0x10] sm:$0xf]
      %v750 = vld [vmem:[%s744 + $0x14] sm:$0xf]
      %v751 = vld [vmem:[%s744 + $0x18] sm:$0xf]
      %v752 = vld [vmem:[%s744 + $0x1c] sm:$0xf]
      %v753 = vld [vmem:[%s744 + $0x20] sm:$0xf]
      %v754 = vld [vmem:[%s744 + $0x24] sm:$0xf]
      %v755 = vld [vmem:[%s744 + $0x28] sm:$0xf]
      %v756 = vld [vmem:[%s744 + $0x2c] sm:$0xf]
      %v757 = vld [vmem:[%s744 + $0x30] sm:$0xf]
      %v758 = vld [vmem:[%s744 + $0x34] sm:$0xf]
      %v759 = vld [vmem:[%s744 + $0x38] sm:$0xf]
      %v760 = vld [vmem:[%s744 + $0x3c] sm:$0xf]
      %v772 = vunpack.c.l.b16 %v733
      %v773 = vunpack.c.l.b16 %v734
      %v774 = vunpack.c.l.b16 %v735
      %v775 = vunpack.c.l.b16 %v736
      %v776 = vunpack.c.l.b16 %v737
      %v777 = vunpack.c.l.b16 %v738
      %v778 = vunpack.c.l.b16 %v739
      %v779 = vunpack.c.l.b16 %v740
      %v780 = vunpack.c.l.b16 %v741
      %v781 = vunpack.c.l.b16 %v742
      %v782 = vunpack.c.l.b16 %v743
      %v783 = vpack.c.b16 %v773, %v772
      %v784 = vpack.c.b16 %v775, %v774
      %v785 = vpack.c.b16 %v777, %v776
      %v786 = vpack.c.b16 %v779, %v778
      %v787 = vpack.c.b16 %v781, %v780
      %v788 = vpack.c.b16 %v782, %v782
      %v789 = vrot.slane %v783, 1
      %v790 = vrot.slane %v784, 1
      %v791 = vsel %vm585, %v789, %v790
      %v792 = vrot.slane %v785, 1
      %v793 = vsel %vm585, %v790, %v792
      %v794 = vrot.slane %v786, 1
      %v795 = vsel %vm585, %v792, %v794
      %v796 = vrot.slane %v787, 1
      %v797 = vsel %vm585, %v794, %v796
      %v798 = vrot.slane %v788, 1
      %v799 = vsel %vm585, %v796, %v798
      %v821 = vunpack.c.l.b16 %v745
      %v822 = vunpack.c.l.b16 %v746
      %v823 = vunpack.c.l.b16 %v747
      %v824 = vunpack.c.l.b16 %v748
      %v825 = vunpack.c.l.b16 %v749
      %v826 = vunpack.c.l.b16 %v750
      %v827 = vunpack.c.l.b16 %v751
      %v828 = vunpack.c.l.b16 %v752
      %v829 = vunpack.c.l.b16 %v753
      %v830 = vunpack.c.l.b16 %v754
      %v831 = vunpack.c.l.b16 %v755
      %v832 = vunpack.c.l.b16 %v756
      %v833 = vunpack.c.l.b16 %v757
      %v834 = vunpack.c.l.b16 %v758
      %v835 = vunpack.c.l.b16 %v759
      %v836 = vunpack.c.l.b16 %v760
      %v837 = vpack.c.b16 %v822, %v821
      %v838 = vpack.c.b16 %v824, %v823
      %v839 = vpack.c.b16 %v826, %v825
      %v840 = vpack.c.b16 %v828, %v827
      %v841 = vpack.c.b16 %v830, %v829
      %v842 = vpack.c.b16 %v832, %v831
      %v843 = vpack.c.b16 %v834, %v833
      %v844 = vpack.c.b16 %v836, %v835
      %853 = vmatprep.subr.bf16.mxu0 0
      %854 = vmatpush1.bf16.msra.mxu0 %v837
      %855 = vmatprep.subr.bf16.mxu0 0
      %856 = vmatpush1.bf16.msra.mxu0 %v838
      %857 = vmatprep.subr.bf16.mxu0 0
      %858 = vmatpush1.bf16.msra.mxu0 %v839
      %859 = vmatprep.subr.bf16.mxu0 0
      %860 = vmatpush1.bf16.msra.mxu0 %v840
      %861 = vmatprep.subr.bf16.mxu0 0
      %862 = vmatpush1.bf16.msra.mxu0 %v841
      %863 = vmatprep.subr.bf16.mxu0 0
      %864 = vmatpush1.bf16.msra.mxu0 %v842
      %865 = vmatprep.subr.bf16.mxu0 0
      %866 = vmatpush1.bf16.msra.mxu0 %v843
      %867 = vmatprep.subr.bf16.mxu0 0
      %868 = vmatpush1.bf16.msra.mxu0 %v844
      %869 = vmatprep.subr.bf16.mxu0 0
      %870 = vmatpush1.bf16.msra.mxu0 0
      %871 = vmatprep.subr.bf16.mxu0 0
      %872 = vmatpush1.bf16.msra.mxu0 0
      %873 = vmatprep.subr.bf16.mxu0 0
      %874 = vmatpush1.bf16.msra.mxu0 0
      %875 = vmatprep.subr.bf16.mxu0 0
      %876 = vmatpush1.bf16.msra.mxu0 0
      %877 = vmatprep.subr.bf16.mxu0 0
      %878 = vmatpush1.bf16.msra.mxu0 0
      %879 = vmatprep.subr.bf16.mxu0 0
      %880 = vmatpush1.bf16.msra.mxu0 0
      %881 = vmatprep.subr.bf16.mxu0 0
      %882 = vmatpush1.bf16.msra.mxu0 0
      %883 = vmatprep.subr.bf16.mxu0 0
      %884 = vmatpush1.bf16.msra.mxu0 0
      %885 = vmatprep.mubr.bf16.mxu0 0
      %886 = vmatmul.mubr.bf16.gmra.mrb[0].mxu0 %v791
      %v887 = vpop.f32.mrb[0].mxu0
      %v888 = vadd.f32 0.0, %v887
      %v889 = vpop.f32.mrb[0].mxu0
      %v890 = vpop.f32.mrb[0].mxu0
      %v891 = vadd.f32 0.0, %v890
      %v892 = vpop.f32.mrb[0].mxu0
      %893 = vmatprep.mubr.bf16.mxu0 0
      %894 = vmatmul.mubr.bf16.gmra.mrb[0].mxu0 %v793
      %v895 = vpop.f32.mrb[0].mxu0
      %v896 = vadd.f32 0.0, %v895
      %v897 = vpop.f32.mrb[0].mxu0
      %v898 = vpop.f32.mrb[0].mxu0
      %v899 = vadd.f32 0.0, %v898
      %v900 = vpop.f32.mrb[0].mxu0
      %901 = vmatprep.mubr.bf16.mxu0 0
      %902 = vmatmul.mubr.bf16.gmra.mrb[0].mxu0 %v795
      %v903 = vpop.f32.mrb[0].mxu0
      %v904 = vadd.f32 0.0, %v903
      %v905 = vpop.f32.mrb[0].mxu0
      %v906 = vpop.f32.mrb[0].mxu0
      %v907 = vadd.f32 0.0, %v906
      %v908 = vpop.f32.mrb[0].mxu0
      %909 = vmatprep.mubr.bf16.mxu0 0
      %910 = vmatmul.mubr.bf16.gmra.mrb[0].mxu0 %v797
      %v911 = vpop.f32.mrb[0].mxu0
      %v912 = vadd.f32 0.0, %v911
      %v913 = vpop.f32.mrb[0].mxu0
      %v914 = vpop.f32.mrb[0].mxu0
      %v915 = vadd.f32 0.0, %v914
      %v916 = vpop.f32.mrb[0].mxu0
      %917 = vmatprep.mubr.bf16.mxu0 0
      %918 = vmatmul.mubr.bf16.gmra.mrb[0].mxu0 %v799
      %v919 = vpop.f32.mrb[0].mxu0
      %v920 = vadd.f32 0.0, %v919
      %v921 = vpop.f32.mrb[0].mxu0
      %v922 = vpop.f32.mrb[0].mxu0
      %v923 = vadd.f32 0.0, %v922
      %v924 = vpop.f32.mrb[0].mxu0
      %925 = vdwg.mxu0
      %v926 = vadd.f32 %v723, %v888
      %v927 = vadd.f32 %v724, %v891
      %v928 = vadd.f32 %v725, %v896
      %v929 = vadd.f32 %v726, %v899
      %v930 = vadd.f32 %v727, %v904
      %v931 = vadd.f32 %v728, %v907
      %v932 = vadd.f32 %v729, %v912
      %v933 = vadd.f32 %v730, %v915
      %v934 = vadd.f32 %v731, %v920
      %v935 = vadd.f32 %v732, %v923
      %v936 = vld [vmem:[%s183 + $0x2c] sm:$0x3]
      %s937 = scalar_lea.vmem %s1, 256
      %v938 = vld [vmem:[%s937] sm:$0xf]
      %v939 = vld [vmem:[%s937 + $0x4] sm:$0xf]
      %v940 = vld [vmem:[%s937 + $0x8] sm:$0xf]
      %v941 = vld [vmem:[%s937 + $0xc] sm:$0xf]
      %v942 = vld [vmem:[%s937 + $0x10] sm:$0xf]
      %v943 = vld [vmem:[%s937 + $0x14] sm:$0xf]
      %v944 = vld [vmem:[%s937 + $0x18] sm:$0xf]
      %v945 = vld [vmem:[%s937 + $0x1c] sm:$0xf]
      %v946 = vld [vmem:[%s937 + $0x20] sm:$0xf]
      %v947 = vld [vmem:[%s937 + $0x24] sm:$0xf]
      %v948 = vld [vmem:[%s937 + $0x28] sm:$0xf]
      %v949 = vld [vmem:[%s937 + $0x2c] sm:$0xf]
      %v950 = vld [vmem:[%s937 + $0x30] sm:$0xf]
      %v951 = vld [vmem:[%s937 + $0x34] sm:$0xf]
      %v952 = vld [vmem:[%s937 + $0x38] sm:$0xf]
      %v953 = vld [vmem:[%s937 + $0x3c] sm:$0xf]
      %v955 = vunpack.c.l.b16 %v936
      %v956 = vpack.c.b16 %v955, %v955
      %vm957 = vsmask.f32 6400
      %v959 = vshrl.u32 %v783, 16
      %v961 = vrot.slane %v959, 1
      %v962 = vshll.u32 %v783, 16
      %v964 = vrot.slane %v962, 2
      %v965 = vor.u32 %v961, %v964
      %v967 = vshrl.u32 %v784, 16
      %v969 = vrot.slane %v967, 1
      %v970 = vshll.u32 %v784, 16
      %v972 = vrot.slane %v970, 2
      %v973 = vor.u32 %v969, %v972
      %v974 = vsel %vm957, %v965, %v973
      %v976 = vshrl.u32 %v785, 16
      %v978 = vrot.slane %v976, 1
      %v979 = vshll.u32 %v785, 16
      %v981 = vrot.slane %v979, 2
      %v982 = vor.u32 %v978, %v981
      %v983 = vsel %vm957, %v973, %v982
      %v985 = vshrl.u32 %v786, 16
      %v987 = vrot.slane %v985, 1
      %v988 = vshll.u32 %v786, 16
      %v990 = vrot.slane %v988, 2
      %v991 = vor.u32 %v987, %v990
      %v992 = vsel %vm957, %v982, %v991
      %v994 = vshrl.u32 %v787, 16
      %v996 = vrot.slane %v994, 1
      %v997 = vshll.u32 %v787, 16
      %v999 = vrot.slane %v997, 2
      %v1000 = vor.u32 %v996, %v999
      %v1001 = vsel %vm957, %v991, %v1000
      %v1003 = vshrl.u32 %v956, 16
      %v1005 = vrot.slane %v1003, 1
      %v1006 = vshll.u32 %v956, 16
      %v1008 = vrot.slane %v1006, 2
      %v1009 = vor.u32 %v1005, %v1008
      %v1010 = vsel %vm957, %v1000, %v1009
      %v1032 = vunpack.c.l.b16 %v938
      %v1033 = vunpack.c.l.b16 %v939
      %v1034 = vunpack.c.l.b16 %v940
      %v1035 = vunpack.c.l.b16 %v941
      %v1036 = vunpack.c.l.b16 %v942
      %v1037 = vunpack.c.l.b16 %v943
      %v1038 = vunpack.c.l.b16 %v944
      %v1039 = vunpack.c.l.b16 %v945
      %v1040 = vunpack.c.l.b16 %v946
      %v1041 = vunpack.c.l.b16 %v947
      %v1042 = vunpack.c.l.b16 %v948
      %v1043 = vunpack.c.l.b16 %v949
      %v1044 = vunpack.c.l.b16 %v950
      %v1045 = vunpack.c.l.b16 %v951
      %v1046 = vunpack.c.l.b16 %v952
      %v1047 = vunpack.c.l.b16 %v953
      %v1048 = vpack.c.b16 %v1033, %v1032
      %v1049 = vpack.c.b16 %v1035, %v1034
      %v1050 = vpack.c.b16 %v1037, %v1036
      %v1051 = vpack.c.b16 %v1039, %v1038
      %v1052 = vpack.c.b16 %v1041, %v1040
      %v1053 = vpack.c.b16 %v1043, %v1042
      %v1054 = vpack.c.b16 %v1045, %v1044
      %v1055 = vpack.c.b16 %v1047, %v1046
      %1064 = vmatprep.subr.bf16.mxu0 0
      %1065 = vmatpush1.bf16.msra.mxu0 %v1048
      %1066 = vmatprep.subr.bf16.mxu0 0
      %1067 = vmatpush1.bf16.msra.mxu0 %v1049
      %1068 = vmatprep.subr.bf16.mxu0 0
      %1069 = vmatpush1.bf16.msra.mxu0 %v1050
      %1070 = vmatprep.subr.bf16.mxu0 0
      %1071 = vmatpush1.bf16.msra.mxu0 %v1051
      %1072 = vmatprep.subr.bf16.mxu0 0
      %1073 = vmatpush1.bf16.msra.mxu0 %v1052
      %1074 = vmatprep.subr.bf16.mxu0 0
      %1075 = vmatpush1.bf16.msra.mxu0 %v1053
      %1076 = vmatprep.subr.bf16.mxu0 0
      %1077 = vmatpush1.bf16.msra.mxu0 %v1054
      %1078 = vmatprep.subr.bf16.mxu0 0
      %1079 = vmatpush1.bf16.msra.mxu0 %v1055
      %1080 = vmatprep.subr.bf16.mxu0 0
      %1081 = vmatpush1.bf16.msra.mxu0 0
      %1082 = vmatprep.subr.bf16.mxu0 0
      %1083 = vmatpush1.bf16.msra.mxu0 0
      %1084 = vmatprep.subr.bf16.mxu0 0
      %1085 = vmatpush1.bf16.msra.mxu0 0
      %1086 = vmatprep.subr.bf16.mxu0 0
      %1087 = vmatpush1.bf16.msra.mxu0 0
      %1088 = vmatprep.subr.bf16.mxu0 0
      %1089 = vmatpush1.bf16.msra.mxu0 0
      %1090 = vmatprep.subr.bf16.mxu0 0
      %1091 = vmatpush1.bf16.msra.mxu0 0
      %1092 = vmatprep.subr.bf16.mxu0 0
      %1093 = vmatpush1.bf16.msra.mxu0 0
      %1094 = vmatprep.subr.bf16.mxu0 0
      %1095 = vmatpush1.bf16.msra.mxu0 0
      %1096 = vmatprep.mubr.bf16.mxu0 0
      %1097 = vmatmul.mubr.bf16.gmra.mrb[0].mxu0 %v974
      %v1098 = vpop.f32.mrb[0].mxu0
      %v1099 = vadd.f32 0.0, %v1098
      %v1100 = vpop.f32.mrb[0].mxu0
      %v1101 = vpop.f32.mrb[0].mxu0
      %v1102 = vadd.f32 0.0, %v1101
      %v1103 = vpop.f32.mrb[0].mxu0
      %1104 = vmatprep.mubr.bf16.mxu0 0
      %1105 = vmatmul.mubr.bf16.gmra.mrb[0].mxu0 %v983
      %v1106 = vpop.f32.mrb[0].mxu0
      %v1107 = vadd.f32 0.0, %v1106
      %v1108 = vpop.f32.mrb[0].mxu0
      %v1109 = vpop.f32.mrb[0].mxu0
      %v1110 = vadd.f32 0.0, %v1109
      %v1111 = vpop.f32.mrb[0].mxu0
      %1112 = vmatprep.mubr.bf16.mxu0 0
      %1113 = vmatmul.mubr.bf16.gmra.mrb[0].mxu0 %v992
      %v1114 = vpop.f32.mrb[0].mxu0
      %v1115 = vadd.f32 0.0, %v1114
      %v1116 = vpop.f32.mrb[0].mxu0
      %v1117 = vpop.f32.mrb[0].mxu0
      %v1118 = vadd.f32 0.0, %v1117
      %v1119 = vpop.f32.mrb[0].mxu0
      %1120 = vmatprep.mubr.bf16.mxu0 0
      %1121 = vmatmul.mubr.bf16.gmra.mrb[0].mxu0 %v1001
      %v1122 = vpop.f32.mrb[0].mxu0
      %v1123 = vadd.f32 0.0, %v1122
      %v1124 = vpop.f32.mrb[0].mxu0
      %v1125 = vpop.f32.mrb[0].mxu0
      %v1126 = vadd.f32 0.0, %v1125
      %v1127 = vpop.f32.mrb[0].mxu0
      %1128 = vmatprep.mubr.bf16.mxu0 0
      %1129 = vmatmul.mubr.bf16.gmra.mrb[0].mxu0 %v1010
      %v1130 = vpop.f32.mrb[0].mxu0
      %v1131 = vadd.f32 0.0, %v1130
      %v1132 = vpop.f32.mrb[0].mxu0
      %v1133 = vpop.f32.mrb[0].mxu0
      %v1134 = vadd.f32 0.0, %v1133
      %v1135 = vpop.f32.mrb[0].mxu0
      %1136 = vdwg.mxu0
      %v1137 = vadd.f32 %v926, %v1099
      %v1138 = vadd.f32 %v927, %v1102
      %v1139 = vadd.f32 %v928, %v1107
      %v1140 = vadd.f32 %v929, %v1110
      %v1141 = vadd.f32 %v930, %v1115
      %v1142 = vadd.f32 %v931, %v1118
      %v1143 = vadd.f32 %v932, %v1123
      %v1144 = vadd.f32 %v933, %v1126
      %v1145 = vadd.f32 %v934, %v1131
      %v1146 = vadd.f32 %v935, %v1134
      %v1147 = vld [vmem:[%s183 + $0x4] sm:$0xc]
      %s1148 = scalar_lea.vmem %s1, 320
      %v1149 = vld [vmem:[%s1148] sm:$0xf]
      %v1150 = vld [vmem:[%s1148 + $0x4] sm:$0xf]
      %v1151 = vld [vmem:[%s1148 + $0x8] sm:$0xf]
      %v1152 = vld [vmem:[%s1148 + $0xc] sm:$0xf]
      %v1153 = vld [vmem:[%s1148 + $0x10] sm:$0xf]
      %v1154 = vld [vmem:[%s1148 + $0x14] sm:$0xf]
      %v1155 = vld [vmem:[%s1148 + $0x18] sm:$0xf]
      %v1156 = vld [vmem:[%s1148 + $0x1c] sm:$0xf]
      %v1157 = vld [vmem:[%s1148 + $0x20] sm:$0xf]
      %v1158 = vld [vmem:[%s1148 + $0x24] sm:$0xf]
      %v1159 = vld [vmem:[%s1148 + $0x28] sm:$0xf]
      %v1160 = vld [vmem:[%s1148 + $0x2c] sm:$0xf]
      %v1161 = vld [vmem:[%s1148 + $0x30] sm:$0xf]
      %v1162 = vld [vmem:[%s1148 + $0x34] sm:$0xf]
      %v1163 = vld [vmem:[%s1148 + $0x38] sm:$0xf]
      %v1164 = vld [vmem:[%s1148 + $0x3c] sm:$0xf]
      %v1166 = vunpack.c.l.b16 %v1147
      %v1167 = vpack.c.b16 %v773, %v1166
      %vm1168 = vcmask 1045504
      %v1169 = vrot.slane %v1167, 2
      %v1170 = vrot.slane %v784, 2
      %v1171 = vsel %vm1168, %v1169, %v1170
      %v1172 = vrot.slane %v785, 2
      %v1173 = vsel %vm1168, %v1170, %v1172
      %v1174 = vrot.slane %v786, 2
      %v1175 = vsel %vm1168, %v1172, %v1174
      %v1176 = vrot.slane %v787, 2
      %v1177 = vsel %vm1168, %v1174, %v1176
      %v1178 = vrot.slane %v956, 2
      %v1179 = vsel %vm1168, %v1176, %v1178
      %v1201 = vunpack.c.l.b16 %v1149
      %v1202 = vunpack.c.l.b16 %v1150
      %v1203 = vunpack.c.l.b16 %v1151
      %v1204 = vunpack.c.l.b16 %v1152
      %v1205 = vunpack.c.l.b16 %v1153
      %v1206 = vunpack.c.l.b16 %v1154
      %v1207 = vunpack.c.l.b16 %v1155
      %v1208 = vunpack.c.l.b16 %v1156
      %v1209 = vunpack.c.l.b16 %v1157
      %v1210 = vunpack.c.l.b16 %v1158
      %v1211 = vunpack.c.l.b16 %v1159
      %v1212 = vunpack.c.l.b16 %v1160
      %v1213 = vunpack.c.l.b16 %v1161
      %v1214 = vunpack.c.l.b16 %v1162
      %v1215 = vunpack.c.l.b16 %v1163
      %v1216 = vunpack.c.l.b16 %v1164
      %v1217 = vpack.c.b16 %v1202, %v1201
      %v1218 = vpack.c.b16 %v1204, %v1203
      %v1219 = vpack.c.b16 %v1206, %v1205
      %v1220 = vpack.c.b16 %v1208, %v1207
      %v1221 = vpack.c.b16 %v1210, %v1209
      %v1222 = vpack.c.b16 %v1212, %v1211
      %v1223 = vpack.c.b16 %v1214, %v1213
      %v1224 = vpack.c.b16 %v1216, %v1215
      %1233 = vmatprep.subr.bf16.mxu0 0
      %1234 = vmatpush1.bf16.msra.mxu0 %v1217
      %1235 = vmatprep.subr.bf16.mxu0 0
      %1236 = vmatpush1.bf16.msra.mxu0 %v1218
      %1237 = vmatprep.subr.bf16.mxu0 0
      %1238 = vmatpush1.bf16.msra.mxu0 %v1219
      %1239 = vmatprep.subr.bf16.mxu0 0
      %1240 = vmatpush1.bf16.msra.mxu0 %v1220
      %1241 = vmatprep.subr.bf16.mxu0 0
      %1242 = vmatpush1.bf16.msra.mxu0 %v1221
      %1243 = vmatprep.subr.bf16.mxu0 0
      %1244 = vmatpush1.bf16.msra.mxu0 %v1222
      %1245 = vmatprep.subr.bf16.mxu0 0
      %1246 = vmatpush1.bf16.msra.mxu0 %v1223
      %1247 = vmatprep.subr.bf16.mxu0 0
      %1248 = vmatpush1.bf16.msra.mxu0 %v1224
      %1249 = vmatprep.subr.bf16.mxu0 0
      %1250 = vmatpush1.bf16.msra.mxu0 0
      %1251 = vmatprep.subr.bf16.mxu0 0
      %1252 = vmatpush1.bf16.msra.mxu0 0
      %1253 = vmatprep.subr.bf16.mxu0 0
      %1254 = vmatpush1.bf16.msra.mxu0 0
      %1255 = vmatprep.subr.bf16.mxu0 0
      %1256 = vmatpush1.bf16.msra.mxu0 0
      %1257 = vmatprep.subr.bf16.mxu0 0
      %1258 = vmatpush1.bf16.msra.mxu0 0
      %1259 = vmatprep.subr.bf16.mxu0 0
      %1260 = vmatpush1.bf16.msra.mxu0 0
      %1261 = vmatprep.subr.bf16.mxu0 0
      %1262 = vmatpush1.bf16.msra.mxu0 0
      %1263 = vmatprep.subr.bf16.mxu0 0
      %1264 = vmatpush1.bf16.msra.mxu0 0
      %1265 = vmatprep.mubr.bf16.mxu0 0
      %1266 = vmatmul.mubr.bf16.gmra.mrb[0].mxu0 %v1171
      %v1267 = vpop.f32.mrb[0].mxu0
      %v1268 = vadd.f32 0.0, %v1267
      %v1269 = vpop.f32.mrb[0].mxu0
      %v1270 = vpop.f32.mrb[0].mxu0
      %v1271 = vadd.f32 0.0, %v1270
      %v1272 = vpop.f32.mrb[0].mxu0
      %1273 = vmatprep.mubr.bf16.mxu0 0
      %1274 = vmatmul.mubr.bf16.gmra.mrb[0].mxu0 %v1173
      %v1275 = vpop.f32.mrb[0].mxu0
      %v1276 = vadd.f32 0.0, %v1275
      %v1277 = vpop.f32.mrb[0].mxu0
      %v1278 = vpop.f32.mrb[0].mxu0
      %v1279 = vadd.f32 0.0, %v1278
      %v1280 = vpop.f32.mrb[0].mxu0
      %1281 = vmatprep.mubr.bf16.mxu0 0
      %1282 = vmatmul.mubr.bf16.gmra.mrb[0].mxu0 %v1175
      %v1283 = vpop.f32.mrb[0].mxu0
      %v1284 = vadd.f32 0.0, %v1283
      %v1285 = vpop.f32.mrb[0].mxu0
      %v1286 = vpop.f32.mrb[0].mxu0
      %v1287 = vadd.f32 0.0, %v1286
      %v1288 = vpop.f32.mrb[0].mxu0
      %1289 = vmatprep.mubr.bf16.mxu0 0
      %1290 = vmatmul.mubr.bf16.gmra.mrb[0].mxu0 %v1177
      %v1291 = vpop.f32.mrb[0].mxu0
      %v1292 = vadd.f32 0.0, %v1291
      %v1293 = vpop.f32.mrb[0].mxu0
      %v1294 = vpop.f32.mrb[0].mxu0
      %v1295 = vadd.f32 0.0, %v1294
      %v1296 = vpop.f32.mrb[0].mxu0
      %1297 = vmatprep.mubr.bf16.mxu0 0
      %1298 = vmatmul.mubr.bf16.gmra.mrb[0].mxu0 %v1179
      %v1299 = vpop.f32.mrb[0].mxu0
      %v1300 = vadd.f32 0.0, %v1299
      %v1301 = vpop.f32.mrb[0].mxu0
      %v1302 = vpop.f32.mrb[0].mxu0
      %v1303 = vadd.f32 0.0, %v1302
      %v1304 = vpop.f32.mrb[0].mxu0
      %1305 = vdwg.mxu0
      %v1306 = vadd.f32 %v1137, %v1268
      %v1307 = vadd.f32 %v1138, %v1271
      %v1308 = vadd.f32 %v1139, %v1276
      %v1309 = vadd.f32 %v1140, %v1279
      %v1310 = vadd.f32 %v1141, %v1284
      %v1311 = vadd.f32 %v1142, %v1287
      %v1312 = vadd.f32 %v1143, %v1292
      %v1313 = vadd.f32 %v1144, %v1295
      %v1314 = vadd.f32 %v1145, %v1300
      %v1315 = vadd.f32 %v1146, %v1303
      %v1316 = vld [vmem:[%s183 + $0x8] sm:$0xc]
      %v1317 = vld [vmem:[%s183 + $0xc] sm:$0xf]
      %v1318 = vld [vmem:[%s183 + $0x10] sm:$0xf]
      %v1319 = vld [vmem:[%s183 + $0x14] sm:$0xf]
      %v1320 = vld [vmem:[%s183 + $0x18] sm:$0xf]
      %v1321 = vld [vmem:[%s183 + $0x1c] sm:$0xf]
      %v1322 = vld [vmem:[%s183 + $0x20] sm:$0xf]
      %v1323 = vld [vmem:[%s183 + $0x24] sm:$0xf]
      %v1324 = vld [vmem:[%s183 + $0x28] sm:$0xf]
      %v1325 = vld [vmem:[%s183 + $0x2c] sm:$0xf]
      %v1326 = vld [vmem:[%s183 + $0x30] sm:$0x3]
      %s1327 = scalar_lea.vmem %s1, 384
      %v1328 = vld [vmem:[%s1327] sm:$0xf]
      %v1329 = vld [vmem:[%s1327 + $0x4] sm:$0xf]
      %v1330 = vld [vmem:[%s1327 + $0x8] sm:$0xf]
      %v1331 = vld [vmem:[%s1327 + $0xc] sm:$0xf]
      %v1332 = vld [vmem:[%s1327 + $0x10] sm:$0xf]
      %v1333 = vld [vmem:[%s1327 + $0x14] sm:$0xf]
      %v1334 = vld [vmem:[%s1327 + $0x18] sm:$0xf]
      %v1335 = vld [vmem:[%s1327 + $0x1c] sm:$0xf]
      %v1336 = vld [vmem:[%s1327 + $0x20] sm:$0xf]
      %v1337 = vld [vmem:[%s1327 + $0x24] sm:$0xf]
      %v1338 = vld [vmem:[%s1327 + $0x28] sm:$0xf]
      %v1339 = vld [vmem:[%s1327 + $0x2c] sm:$0xf]
      %v1340 = vld [vmem:[%s1327 + $0x30] sm:$0xf]
      %v1341 = vld [vmem:[%s1327 + $0x34] sm:$0xf]
      %v1342 = vld [vmem:[%s1327 + $0x38] sm:$0xf]
      %v1343 = vld [vmem:[%s1327 + $0x3c] sm:$0xf]
      %v1355 = vunpack.c.l.b16 %v1316
      %v1356 = vunpack.c.l.b16 %v1317
      %v1357 = vunpack.c.l.b16 %v1318
      %v1358 = vunpack.c.l.b16 %v1319
      %v1359 = vunpack.c.l.b16 %v1320
      %v1360 = vunpack.c.l.b16 %v1321
      %v1361 = vunpack.c.l.b16 %v1322
      %v1362 = vunpack.c.l.b16 %v1323
      %v1363 = vunpack.c.l.b16 %v1324
      %v1364 = vunpack.c.l.b16 %v1325
      %v1365 = vunpack.c.l.b16 %v1326
      %v1366 = vpack.c.b16 %v1356, %v1355
      %v1367 = vpack.c.b16 %v1358, %v1357
      %v1368 = vpack.c.b16 %v1360, %v1359
      %v1369 = vpack.c.b16 %v1362, %v1361
      %v1370 = vpack.c.b16 %v1364, %v1363
      %v1371 = vpack.c.b16 %v1365, %v1365
      %v1372 = vrot.slane %v1366, 2
      %v1373 = vrot.slane %v1367, 2
      %v1374 = vsel %vm1168, %v1372, %v1373
      %v1375 = vrot.slane %v1368, 2
      %v1376 = vsel %vm1168, %v1373, %v1375
      %v1377 = vrot.slane %v1369, 2
      %v1378 = vsel %vm1168, %v1375, %v1377
      %v1379 = vrot.slane %v1370, 2
      %v1380 = vsel %vm1168, %v1377, %v1379
      %v1381 = vrot.slane %v1371, 2
      %v1382 = vsel %vm1168, %v1379, %v1381
      %v1404 = vunpack.c.l.b16 %v1328
      %v1405 = vunpack.c.l.b16 %v1329
      %v1406 = vunpack.c.l.b16 %v1330
      %v1407 = vunpack.c.l.b16 %v1331
      %v1408 = vunpack.c.l.b16 %v1332
      %v1409 = vunpack.c.l.b16 %v1333
      %v1410 = vunpack.c.l.b16 %v1334
      %v1411 = vunpack.c.l.b16 %v1335
      %v1412 = vunpack.c.l.b16 %v1336
      %v1413 = vunpack.c.l.b16 %v1337
      %v1414 = vunpack.c.l.b16 %v1338
      %v1415 = vunpack.c.l.b16 %v1339
      %v1416 = vunpack.c.l.b16 %v1340
      %v1417 = vunpack.c.l.b16 %v1341
      %v1418 = vunpack.c.l.b16 %v1342
      %v1419 = vunpack.c.l.b16 %v1343
      %v1420 = vpack.c.b16 %v1405, %v1404
      %v1421 = vpack.c.b16 %v1407, %v1406
      %v1422 = vpack.c.b16 %v1409, %v1408
      %v1423 = vpack.c.b16 %v1411, %v1410
      %v1424 = vpack.c.b16 %v1413, %v1412
      %v1425 = vpack.c.b16 %v1415, %v1414
      %v1426 = vpack.c.b16 %v1417, %v1416
      %v1427 = vpack.c.b16 %v1419, %v1418
      %1436 = vmatprep.subr.bf16.mxu0 0
      %1437 = vmatpush1.bf16.msra.mxu0 %v1420
      %1438 = vmatprep.subr.bf16.mxu0 0
      %1439 = vmatpush1.bf16.msra.mxu0 %v1421
      %1440 = vmatprep.subr.bf16.mxu0 0
      %1441 = vmatpush1.bf16.msra.mxu0 %v1422
      %1442 = vmatprep.subr.bf16.mxu0 0
      %1443 = vmatpush1.bf16.msra.mxu0 %v1423
      %1444 = vmatprep.subr.bf16.mxu0 0
      %1445 = vmatpush1.bf16.msra.mxu0 %v1424
      %1446 = vmatprep.subr.bf16.mxu0 0
      %1447 = vmatpush1.bf16.msra.mxu0 %v1425
      %1448 = vmatprep.subr.bf16.mxu0 0
      %1449 = vmatpush1.bf16.msra.mxu0 %v1426
      %1450 = vmatprep.subr.bf16.mxu0 0
      %1451 = vmatpush1.bf16.msra.mxu0 %v1427
      %1452 = vmatprep.subr.bf16.mxu0 0
      %1453 = vmatpush1.bf16.msra.mxu0 0
      %1454 = vmatprep.subr.bf16.mxu0 0
      %1455 = vmatpush1.bf16.msra.mxu0 0
      %1456 = vmatprep.subr.bf16.mxu0 0
      %1457 = vmatpush1.bf16.msra.mxu0 0
      %1458 = vmatprep.subr.bf16.mxu0 0
      %1459 = vmatpush1.bf16.msra.mxu0 0
      %1460 = vmatprep.subr.bf16.mxu0 0
      %1461 = vmatpush1.bf16.msra.mxu0 0
      %1462 = vmatprep.subr.bf16.mxu0 0
      %1463 = vmatpush1.bf16.msra.mxu0 0
      %1464 = vmatprep.subr.bf16.mxu0 0
      %1465 = vmatpush1.bf16.msra.mxu0 0
      %1466 = vmatprep.subr.bf16.mxu0 0
      %1467 = vmatpush1.bf16.msra.mxu0 0
      %1468 = vmatprep.mubr.bf16.mxu0 0
      %1469 = vmatmul.mubr.bf16.gmra.mrb[0].mxu0 %v1374
      %v1470 = vpop.f32.mrb[0].mxu0
      %v1471 = vadd.f32 0.0, %v1470
      %v1472 = vpop.f32.mrb[0].mxu0
      %v1473 = vpop.f32.mrb[0].mxu0
      %v1474 = vadd.f32 0.0, %v1473
      %v1475 = vpop.f32.mrb[0].mxu0
      %1476 = vmatprep.mubr.bf16.mxu0 0
      %1477 = vmatmul.mubr.bf16.gmra.mrb[0].mxu0 %v1376
      %v1478 = vpop.f32.mrb[0].mxu0
      %v1479 = vadd.f32 0.0, %v1478
      %v1480 = vpop.f32.mrb[0].mxu0
      %v1481 = vpop.f32.mrb[0].mxu0
      %v1482 = vadd.f32 0.0, %v1481
      %v1483 = vpop.f32.mrb[0].mxu0
      %1484 = vmatprep.mubr.bf16.mxu0 0
      %1485 = vmatmul.mubr.bf16.gmra.mrb[0].mxu0 %v1378
      %v1486 = vpop.f32.mrb[0].mxu0
      %v1487 = vadd.f32 0.0, %v1486
      %v1488 = vpop.f32.mrb[0].mxu0
      %v1489 = vpop.f32.mrb[0].mxu0
      %v1490 = vadd.f32 0.0, %v1489
      %v1491 = vpop.f32.mrb[0].mxu0
      %1492 = vmatprep.mubr.bf16.mxu0 0
      %1493 = vmatmul.mubr.bf16.gmra.mrb[0].mxu0 %v1380
      %v1494 = vpop.f32.mrb[0].mxu0
      %v1495 = vadd.f32 0.0, %v1494
      %v1496 = vpop.f32.mrb[0].mxu0
      %v1497 = vpop.f32.mrb[0].mxu0
      %v1498 = vadd.f32 0.0, %v1497
      %v1499 = vpop.f32.mrb[0].mxu0
      %1500 = vmatprep.mubr.bf16.mxu0 0
      %1501 = vmatmul.mubr.bf16.gmra.mrb[0].mxu0 %v1382
      %v1502 = vpop.f32.mrb[0].mxu0
      %v1503 = vadd.f32 0.0, %v1502
      %v1504 = vpop.f32.mrb[0].mxu0
      %v1505 = vpop.f32.mrb[0].mxu0
      %v1506 = vadd.f32 0.0, %v1505
      %v1507 = vpop.f32.mrb[0].mxu0
      %1508 = vdwg.mxu0
      %v1509 = vadd.f32 %v1306, %v1471
      %v1510 = vadd.f32 %v1307, %v1474
      %v1511 = vadd.f32 %v1308, %v1479
      %v1512 = vadd.f32 %v1309, %v1482
      %v1513 = vadd.f32 %v1310, %v1487
      %v1514 = vadd.f32 %v1311, %v1490
      %v1515 = vadd.f32 %v1312, %v1495
      %v1516 = vadd.f32 %v1313, %v1498
      %v1517 = vadd.f32 %v1314, %v1503
      %v1518 = vadd.f32 %v1315, %v1506
      %v1519 = vld [vmem:[%s183 + $0x30] sm:$0x7]
      %s1520 = scalar_lea.vmem %s1, 448
      %v1521 = vld [vmem:[%s1520] sm:$0xf]
      %v1522 = vld [vmem:[%s1520 + $0x4] sm:$0xf]
      %v1523 = vld [vmem:[%s1520 + $0x8] sm:$0xf]
      %v1524 = vld [vmem:[%s1520 + $0xc] sm:$0xf]
      %v1525 = vld [vmem:[%s1520 + $0x10] sm:$0xf]
      %v1526 = vld [vmem:[%s1520 + $0x14] sm:$0xf]
      %v1527 = vld [vmem:[%s1520 + $0x18] sm:$0xf]
      %v1528 = vld [vmem:[%s1520 + $0x1c] sm:$0xf]
      %v1529 = vld [vmem:[%s1520 + $0x20] sm:$0xf]
      %v1530 = vld [vmem:[%s1520 + $0x24] sm:$0xf]
      %v1531 = vld [vmem:[%s1520 + $0x28] sm:$0xf]
      %v1532 = vld [vmem:[%s1520 + $0x2c] sm:$0xf]
      %v1533 = vld [vmem:[%s1520 + $0x30] sm:$0xf]
      %v1534 = vld [vmem:[%s1520 + $0x34] sm:$0xf]
      %v1535 = vld [vmem:[%s1520 + $0x38] sm:$0xf]
      %v1536 = vld [vmem:[%s1520 + $0x3c] sm:$0xf]
      %v1538 = vunpack.c.l.b16 %v1519
      %v1539 = vpack.c.b16 %v1538, %v1538
      %vm1540 = vsmask.f32 5376
      %v1542 = vshrl.u32 %v1366, 16
      %v1544 = vrot.slane %v1542, 2
      %v1545 = vshll.u32 %v1366, 16
      %v1547 = vrot.slane %v1545, 3
      %v1548 = vor.u32 %v1544, %v1547
      %v1550 = vshrl.u32 %v1367, 16
      %v1552 = vrot.slane %v1550, 2
      %v1553 = vshll.u32 %v1367, 16
      %v1555 = vrot.slane %v1553, 3
      %v1556 = vor.u32 %v1552, %v1555
      %v1557 = vsel %vm1540, %v1548, %v1556
      %v1559 = vshrl.u32 %v1368, 16
      %v1561 = vrot.slane %v1559, 2
      %v1562 = vshll.u32 %v1368, 16
      %v1564 = vrot.slane %v1562, 3
      %v1565 = vor.u32 %v1561, %v1564
      %v1566 = vsel %vm1540, %v1556, %v1565
      %v1568 = vshrl.u32 %v1369, 16
      %v1570 = vrot.slane %v1568, 2
      %v1571 = vshll.u32 %v1369, 16
      %v1573 = vrot.slane %v1571, 3
      %v1574 = vor.u32 %v1570, %v1573
      %v1575 = vsel %vm1540, %v1565, %v1574
      %v1577 = vshrl.u32 %v1370, 16
      %v1579 = vrot.slane %v1577, 2
      %v1580 = vshll.u32 %v1370, 16
      %v1582 = vrot.slane %v1580, 3
      %v1583 = vor.u32 %v1579, %v1582
      %v1584 = vsel %vm1540, %v1574, %v1583
      %v1586 = vshrl.u32 %v1539, 16
      %v1588 = vrot.slane %v1586, 2
      %v1589 = vshll.u32 %v1539, 16
      %v1591 = vrot.slane %v1589, 3
      %v1592 = vor.u32 %v1588, %v1591
      %v1593 = vsel %vm1540, %v1583, %v1592
      %v1615 = vunpack.c.l.b16 %v1521
      %v1616 = vunpack.c.l.b16 %v1522
      %v1617 = vunpack.c.l.b16 %v1523
      %v1618 = vunpack.c.l.b16 %v1524
      %v1619 = vunpack.c.l.b16 %v1525
      %v1620 = vunpack.c.l.b16 %v1526
      %v1621 = vunpack.c.l.b16 %v1527
      %v1622 = vunpack.c.l.b16 %v1528
      %v1623 = vunpack.c.l.b16 %v1529
      %v1624 = vunpack.c.l.b16 %v1530
      %v1625 = vunpack.c.l.b16 %v1531
      %v1626 = vunpack.c.l.b16 %v1532
      %v1627 = vunpack.c.l.b16 %v1533
      %v1628 = vunpack.c.l.b16 %v1534
      %v1629 = vunpack.c.l.b16 %v1535
      %v1630 = vunpack.c.l.b16 %v1536
      %v1631 = vpack.c.b16 %v1616, %v1615
      %v1632 = vpack.c.b16 %v1618, %v1617
      %v1633 = vpack.c.b16 %v1620, %v1619
      %v1634 = vpack.c.b16 %v1622, %v1621
      %v1635 = vpack.c.b16 %v1624, %v1623
      %v1636 = vpack.c.b16 %v1626, %v1625
      %v1637 = vpack.c.b16 %v1628, %v1627
      %v1638 = vpack.c.b16 %v1630, %v1629
      %1647 = vmatprep.subr.bf16.mxu0 0
      %1648 = vmatpush1.bf16.msra.mxu0 %v1631
      %1649 = vmatprep.subr.bf16.mxu0 0
      %1650 = vmatpush1.bf16.msra.mxu0 %v1632
      %1651 = vmatprep.subr.bf16.mxu0 0
      %1652 = vmatpush1.bf16.msra.mxu0 %v1633
      %1653 = vmatprep.subr.bf16.mxu0 0
      %1654 = vmatpush1.bf16.msra.mxu0 %v1634
      %1655 = vmatprep.subr.bf16.mxu0 0
      %1656 = vmatpush1.bf16.msra.mxu0 %v1635
      %1657 = vmatprep.subr.bf16.mxu0 0
      %1658 = vmatpush1.bf16.msra.mxu0 %v1636
      %1659 = vmatprep.subr.bf16.mxu0 0
      %1660 = vmatpush1.bf16.msra.mxu0 %v1637
      %1661 = vmatprep.subr.bf16.mxu0 0
      %1662 = vmatpush1.bf16.msra.mxu0 %v1638
      %1663 = vmatprep.subr.bf16.mxu0 0
      %1664 = vmatpush1.bf16.msra.mxu0 0
      %1665 = vmatprep.subr.bf16.mxu0 0
      %1666 = vmatpush1.bf16.msra.mxu0 0
      %1667 = vmatprep.subr.bf16.mxu0 0
      %1668 = vmatpush1.bf16.msra.mxu0 0
      %1669 = vmatprep.subr.bf16.mxu0 0
      %1670 = vmatpush1.bf16.msra.mxu0 0
      %1671 = vmatprep.subr.bf16.mxu0 0
      %1672 = vmatpush1.bf16.msra.mxu0 0
      %1673 = vmatprep.subr.bf16.mxu0 0
      %1674 = vmatpush1.bf16.msra.mxu0 0
      %1675 = vmatprep.subr.bf16.mxu0 0
      %1676 = vmatpush1.bf16.msra.mxu0 0
      %1677 = vmatprep.subr.bf16.mxu0 0
      %1678 = vmatpush1.bf16.msra.mxu0 0
      %1679 = vmatprep.mubr.bf16.mxu0 0
      %1680 = vmatmul.mubr.bf16.gmra.mrb[0].mxu0 %v1557
      %v1681 = vpop.f32.mrb[0].mxu0
      %v1682 = vadd.f32 0.0, %v1681
      %v1683 = vpop.f32.mrb[0].mxu0
      %v1684 = vpop.f32.mrb[0].mxu0
      %v1685 = vadd.f32 0.0, %v1684
      %v1686 = vpop.f32.mrb[0].mxu0
      %1687 = vmatprep.mubr.bf16.mxu0 0
      %1688 = vmatmul.mubr.bf16.gmra.mrb[0].mxu0 %v1566
      %v1689 = vpop.f32.mrb[0].mxu0
      %v1690 = vadd.f32 0.0, %v1689
      %v1691 = vpop.f32.mrb[0].mxu0
      %v1692 = vpop.f32.mrb[0].mxu0
      %v1693 = vadd.f32 0.0, %v1692
      %v1694 = vpop.f32.mrb[0].mxu0
      %1695 = vmatprep.mubr.bf16.mxu0 0
      %1696 = vmatmul.mubr.bf16.gmra.mrb[0].mxu0 %v1575
      %v1697 = vpop.f32.mrb[0].mxu0
      %v1698 = vadd.f32 0.0, %v1697
      %v1699 = vpop.f32.mrb[0].mxu0
      %v1700 = vpop.f32.mrb[0].mxu0
      %v1701 = vadd.f32 0.0, %v1700
      %v1702 = vpop.f32.mrb[0].mxu0
      %1703 = vmatprep.mubr.bf16.mxu0 0
      %1704 = vmatmul.mubr.bf16.gmra.mrb[0].mxu0 %v1584
      %v1705 = vpop.f32.mrb[0].mxu0
      %v1706 = vadd.f32 0.0, %v1705
      %v1707 = vpop.f32.mrb[0].mxu0
      %v1708 = vpop.f32.mrb[0].mxu0
      %v1709 = vadd.f32 0.0, %v1708
      %v1710 = vpop.f32.mrb[0].mxu0
      %1711 = vmatprep.mubr.bf16.mxu0 0
      %1712 = vmatmul.mubr.bf16.gmra.mrb[0].mxu0 %v1593
      %v1713 = vpop.f32.mrb[0].mxu0
      %v1714 = vadd.f32 0.0, %v1713
      %v1715 = vpop.f32.mrb[0].mxu0
      %v1716 = vpop.f32.mrb[0].mxu0
      %v1717 = vadd.f32 0.0, %v1716
      %v1718 = vpop.f32.mrb[0].mxu0
      %1719 = vdwg.mxu0
      %v1720 = vadd.f32 %v1509, %v1682
      %v1721 = vadd.f32 %v1510, %v1685
      %v1722 = vadd.f32 %v1511, %v1690
      %v1723 = vadd.f32 %v1512, %v1693
      %v1724 = vadd.f32 %v1513, %v1698
      %v1725 = vadd.f32 %v1514, %v1701
      %v1726 = vadd.f32 %v1515, %v1706
      %v1727 = vadd.f32 %v1516, %v1709
      %v1728 = vadd.f32 %v1517, %v1714
      %v1729 = vadd.f32 %v1518, %v1717
      %v1730 = vld [vmem:[%s183 + $0x8] sm:$0x8]
      %s1731 = scalar_lea.vmem %s1, 512
      %v1732 = vld [vmem:[%s1731] sm:$0xf]
      %v1733 = vld [vmem:[%s1731 + $0x4] sm:$0xf]
      %v1734 = vld [vmem:[%s1731 + $0x8] sm:$0xf]
      %v1735 = vld [vmem:[%s1731 + $0xc] sm:$0xf]
      %v1736 = vld [vmem:[%s1731 + $0x10] sm:$0xf]
      %v1737 = vld [vmem:[%s1731 + $0x14] sm:$0xf]
      %v1738 = vld [vmem:[%s1731 + $0x18] sm:$0xf]
      %v1739 = vld [vmem:[%s1731 + $0x1c] sm:$0xf]
      %v1740 = vld [vmem:[%s1731 + $0x20] sm:$0xf]
      %v1741 = vld [vmem:[%s1731 + $0x24] sm:$0xf]
      %v1742 = vld [vmem:[%s1731 + $0x28] sm:$0xf]
      %v1743 = vld [vmem:[%s1731 + $0x2c] sm:$0xf]
      %v1744 = vld [vmem:[%s1731 + $0x30] sm:$0xf]
      %v1745 = vld [vmem:[%s1731 + $0x34] sm:$0xf]
      %v1746 = vld [vmem:[%s1731 + $0x38] sm:$0xf]
      %v1747 = vld [vmem:[%s1731 + $0x3c] sm:$0xf]
      %v1749 = vunpack.c.l.b16 %v1730
      %v1750 = vpack.c.b16 %v1356, %v1749
      %vm1751 = vcmask 1044480
      %v1752 = vrot.slane %v1750, 3
      %v1753 = vrot.slane %v1367, 3
      %v1754 = vsel %vm1751, %v1752, %v1753
      %v1755 = vrot.slane %v1368, 3
      %v1756 = vsel %vm1751, %v1753, %v1755
      %v1757 = vrot.slane %v1369, 3
      %v1758 = vsel %vm1751, %v1755, %v1757
      %v1759 = vrot.slane %v1370, 3
      %v1760 = vsel %vm1751, %v1757, %v1759
      %v1761 = vrot.slane %v1539, 3
      %v1762 = vsel %vm1751, %v1759, %v1761
      %v1784 = vunpack.c.l.b16 %v1732
      %v1785 = vunpack.c.l.b16 %v1733
      %v1786 = vunpack.c.l.b16 %v1734
      %v1787 = vunpack.c.l.b16 %v1735
      %v1788 = vunpack.c.l.b16 %v1736
      %v1789 = vunpack.c.l.b16 %v1737
      %v1790 = vunpack.c.l.b16 %v1738
      %v1791 = vunpack.c.l.b16 %v1739
      %v1792 = vunpack.c.l.b16 %v1740
      %v1793 = vunpack.c.l.b16 %v1741
      %v1794 = vunpack.c.l.b16 %v1742
      %v1795 = vunpack.c.l.b16 %v1743
      %v1796 = vunpack.c.l.b16 %v1744
      %v1797 = vunpack.c.l.b16 %v1745
      %v1798 = vunpack.c.l.b16 %v1746
      %v1799 = vunpack.c.l.b16 %v1747
      %v1800 = vpack.c.b16 %v1785, %v1784
      %v1801 = vpack.c.b16 %v1787, %v1786
      %v1802 = vpack.c.b16 %v1789, %v1788
      %v1803 = vpack.c.b16 %v1791, %v1790
      %v1804 = vpack.c.b16 %v1793, %v1792
      %v1805 = vpack.c.b16 %v1795, %v1794
      %v1806 = vpack.c.b16 %v1797, %v1796
      %v1807 = vpack.c.b16 %v1799, %v1798
      %1816 = vmatprep.subr.bf16.mxu0 0
      %1817 = vmatpush1.bf16.msra.mxu0 %v1800
      %1818 = vmatprep.subr.bf16.mxu0 0
      %1819 = vmatpush1.bf16.msra.mxu0 %v1801
      %1820 = vmatprep.subr.bf16.mxu0 0
      %1821 = vmatpush1.bf16.msra.mxu0 %v1802
      %1822 = vmatprep.subr.bf16.mxu0 0
      %1823 = vmatpush1.bf16.msra.mxu0 %v1803
      %1824 = vmatprep.subr.bf16.mxu0 0
      %1825 = vmatpush1.bf16.msra.mxu0 %v1804
      %1826 = vmatprep.subr.bf16.mxu0 0
      %1827 = vmatpush1.bf16.msra.mxu0 %v1805
      %1828 = vmatprep.subr.bf16.mxu0 0
      %1829 = vmatpush1.bf16.msra.mxu0 %v1806
      %1830 = vmatprep.subr.bf16.mxu0 0
      %1831 = vmatpush1.bf16.msra.mxu0 %v1807
      %1832 = vmatprep.subr.bf16.mxu0 0
      %1833 = vmatpush1.bf16.msra.mxu0 0
      %1834 = vmatprep.subr.bf16.mxu0 0
      %1835 = vmatpush1.bf16.msra.mxu0 0
      %1836 = vmatprep.subr.bf16.mxu0 0
      %1837 = vmatpush1.bf16.msra.mxu0 0
      %1838 = vmatprep.subr.bf16.mxu0 0
      %1839 = vmatpush1.bf16.msra.mxu0 0
      %1840 = vmatprep.subr.bf16.mxu0 0
      %1841 = vmatpush1.bf16.msra.mxu0 0
      %1842 = vmatprep.subr.bf16.mxu0 0
      %1843 = vmatpush1.bf16.msra.mxu0 0
      %1844 = vmatprep.subr.bf16.mxu0 0
      %1845 = vmatpush1.bf16.msra.mxu0 0
      %1846 = vmatprep.subr.bf16.mxu0 0
      %1847 = vmatpush1.bf16.msra.mxu0 0
      %1848 = vmatprep.mubr.bf16.mxu0 0
      %1849 = vmatmul.mubr.bf16.gmra.mrb[0].mxu0 %v1754
      %v1850 = vpop.f32.mrb[0].mxu0
      %v1851 = vadd.f32 0.0, %v1850
      %v1852 = vpop.f32.mrb[0].mxu0
      %v1853 = vpop.f32.mrb[0].mxu0
      %v1854 = vadd.f32 0.0, %v1853
      %v1855 = vpop.f32.mrb[0].mxu0
      %1856 = vmatprep.mubr.bf16.mxu0 0
      %1857 = vmatmul.mubr.bf16.gmra.mrb[0].mxu0 %v1756
      %v1858 = vpop.f32.mrb[0].mxu0
      %v1859 = vadd.f32 0.0, %v1858
      %v1860 = vpop.f32.mrb[0].mxu0
      %v1861 = vpop.f32.mrb[0].mxu0
      %v1862 = vadd.f32 0.0, %v1861
      %v1863 = vpop.f32.mrb[0].mxu0
      %1864 = vmatprep.mubr.bf16.mxu0 0
      %1865 = vmatmul.mubr.bf16.gmra.mrb[0].mxu0 %v1758
      %v1866 = vpop.f32.mrb[0].mxu0
      %v1867 = vadd.f32 0.0, %v1866
      %v1868 = vpop.f32.mrb[0].mxu0
      %v1869 = vpop.f32.mrb[0].mxu0
      %v1870 = vadd.f32 0.0, %v1869
      %v1871 = vpop.f32.mrb[0].mxu0
      %1872 = vmatprep.mubr.bf16.mxu0 0
      %1873 = vmatmul.mubr.bf16.gmra.mrb[0].mxu0 %v1760
      %v1874 = vpop.f32.mrb[0].mxu0
      %v1875 = vadd.f32 0.0, %v1874
      %v1876 = vpop.f32.mrb[0].mxu0
      %v1877 = vpop.f32.mrb[0].mxu0
      %v1878 = vadd.f32 0.0, %v1877
      %v1879 = vpop.f32.mrb[0].mxu0
      %1880 = vmatprep.mubr.bf16.mxu0 0
      %1881 = vmatmul.mubr.bf16.gmra.mrb[0].mxu0 %v1762
      %v1882 = vpop.f32.mrb[0].mxu0
      %v1883 = vadd.f32 0.0, %v1882
      %v1884 = vpop.f32.mrb[0].mxu0
      %v1885 = vpop.f32.mrb[0].mxu0
      %v1886 = vadd.f32 0.0, %v1885
      %v1887 = vpop.f32.mrb[0].mxu0
      %1888 = vdwg.mxu0
      %v1889 = vadd.f32 %v1720, %v1851
      %v1890 = vadd.f32 %v1721, %v1854
      %v1891 = vadd.f32 %v1722, %v1859
      %v1892 = vadd.f32 %v1723, %v1862
      %v1893 = vadd.f32 %v1724, %v1867
      %v1894 = vadd.f32 %v1725, %v1870
      %v1895 = vadd.f32 %v1726, %v1875
      %v1896 = vadd.f32 %v1727, %v1878
      %v1897 = vadd.f32 %v1728, %v1883
      %v1898 = vadd.f32 %v1729, %v1886
      %v1899 = vld [vmem:[%s2] sm:$0x1]
      %v1901 = vlaneseq
      %v1902 = vshrl.u32 %v1901, 7
      %v1903 = vsub.s32 0, %v1902
      %v1904 = vrot.slane %v1899, %v1903
      %v1906 = vadd.f32 %v1889, %v1904
      %v1907 = vadd.f32 %v1890, %v1904
      %v1908 = vadd.f32 %v1891, %v1904
      %v1909 = vadd.f32 %v1892, %v1904
      %v1910 = vadd.f32 %v1893, %v1904
      %v1911 = vadd.f32 %v1894, %v1904
      %v1912 = vadd.f32 %v1895, %v1904
      %v1913 = vadd.f32 %v1896, %v1904
      %v1914 = vadd.f32 %v1897, %v1904
      %v1915 = vadd.f32 %v1898, %v1904
      %v1916 = vmax.f32 %v1906, 0.0
      %v1917 = vmax.f32 %v1907, 0.0
      %v1918 = vmax.f32 %v1908, 0.0
      %v1919 = vmax.f32 %v1909, 0.0
      %v1920 = vmax.f32 %v1910, 0.0
      %v1921 = vmax.f32 %v1911, 0.0
      %v1922 = vmax.f32 %v1912, 0.0
      %v1923 = vmax.f32 %v1913, 0.0
      %v1924 = vmax.f32 %v1914, 0.0
      %v1925 = vmax.f32 %v1915, 0.0
      %1926 = vst [vmem:[%s192] sm:$0xff] %v1916
      %1927 = vst [vmem:[%s192 + $0x8] sm:$0xff] %v1917
      %1928 = vst [vmem:[%s192 + $0x10] sm:$0xff] %v1918
      %1929 = vst [vmem:[%s192 + $0x18] sm:$0xff] %v1919
      %1930 = vst [vmem:[%s192 + $0x20] sm:$0xff] %v1920
      %1931 = vst [vmem:[%s192 + $0x28] sm:$0xff] %v1921
      %1932 = vst [vmem:[%s192 + $0x30] sm:$0xff] %v1922
      %1933 = vst [vmem:[%s192 + $0x38] sm:$0xff] %v1923
      %1934 = vst [vmem:[%s192 + $0x40] sm:$0xff] %v1924
      %1935 = vst [vmem:[%s192 + $0x48] sm:$0xff] %v1925
      %s1936 = smul.u32 10, %s19
      %p1937 = scmp.lt.s32.totalorder %s18, 1
      %s1938 = scalar_select %p1937, %s18, 1
      %p1939 = scmp.lt.s32.totalorder %s1936, 9
      %s1940 = scalar_select %p1939, %s1936, 9
      %s1941 = smul.addr %s1938, 10
      %s1942 = sadd.s32 %s1940, %s1941
      %s1943 = smul.addr %s1942, 8
      %s1944 = scalar_lea.vmem %s3, %s1943
      // Predicated region
      $region33: #{basic_down_sample.3} parent=31 // pred_check
        %p1945 = pneg %p114
      $region34: #{basic_down_sample.3} parent=31 // pred_check_branch
        %1947 = sbr.rel (%p1945) target = $region36
      $region35: #{basic_down_sample.3} parent=31 // pred_region
        %s1948 = smul.u32 10, %s19
      $region36: #{basic_down_sample.3} parent=31 // pred_fallthru
        _
    $region32: #{basic_down_sample.3} parent=5 // pred_fallthru
      _
    %p1949 = scmp.le.s32.totalorder 2, %s9
    // Predicated region
    $region37: #{basic_down_sample.3} parent=5 // pred_check
      %p1950 = pneg %p1949
    $region38: #{basic_down_sample.3} parent=5 // pred_check_branch
      %1952 = sbr.rel (%p1950) target = $region40
    $region39: #{basic_down_sample.3} parent=5 // pred_region
      %s1953 = ssub.s32 %s9, 2
      // Predicated region
      $region41: #{basic_down_sample.3} parent=39 // pred_check
        %p1954 = pneg %p120
      $region42: #{basic_down_sample.3} parent=39 // pred_check_branch
        %1956 = sbr.rel (%p1954) target = $region44
      $region43: #{basic_down_sample.3} parent=39 // pred_region
        %s1957 = smul.u32 10, %s21
        %p1958 = scmp.lt.s32.totalorder %s20, 1
        %s1959 = scalar_select %p1958, %s20, 1
        %p1960 = scmp.lt.s32.totalorder %s1957, 9
        %s1961 = scalar_select %p1960, %s1957, 9
        %s1962 = smul.addr %s1959, 10
        %s1963 = sadd.s32 %s1961, %s1962
        %s1964 = smul.addr %s1963, 8
        %s1965 = scalar_lea.vmem %s3, %s1964
      $region44: #{basic_down_sample.3} parent=39 // pred_fallthru
        _
    $region40: #{basic_down_sample.3} parent=5 // pred_fallthru
      _
  $region6: #{basic_down_sample.3} parent=0 // loop_footer
    %s13 = sadd.s32 1, %s9
  $region7: #{basic_down_sample.3} parent=0 // loop_footer_branch
    %8 = sbr.rel target = $region3
  $region8: #{basic_down_sample.3} parent=0 // loop_exit
    _

</llo_original>
